<compile_context>
chip_gen: v7x
topology: tpu7x:2x2x1
jax: 0.10.0
libtpu: 0.0.40
codegen_flags: <defaults>
</compile_context>

<pallas_src>
import functools

import jax
import jax.numpy as jnp
from jax.experimental import pallas as pl
from jax.experimental.pallas import tpu as pltpu

HIDDEN = 100
INPUT = 1
HP = 128  # hidden dim padded to one full lane tile


def _lstm_kernel(gx_ref, w_hh_ref, hs_ref, *, seq_len, hp):
    # Zero the (possibly row-padded) lane-dense output block once; rows >= seq_len are
    # sliced off in the wrapper.
    hs_ref[...] = jnp.zeros_like(hs_ref)

    def step(t, carry):
        h, c = carry  # (8, hp) f32, vreg-resident carries (no VMEM round-trip per step)

        # Precomputed input projection + bias for timestep t: (1, 4*hp), gate-aligned.
        # TODO(synk): a stride-0 sublane-broadcast load (pl.ds(t, 8, stride=0)) would skip the
        # per-step (1,4*hp)->(8,4*hp) broadcast if the bundle ever shows it binding.
        gx = gx_ref[pl.ds(t, 1), :]

        # Recurrent projection on the MXU: (8, hp) @ (hp, 4*hp) -> (8, 4*hp).
        # Weights may be bf16; accumulation stays f32.
        # TODO(synk): weight-stationary MXU (matmul_push_rhs once, acc_lhs/pop per step) is the
        # next structural win; kept on jnp.dot here for lowering robustness.
        w = w_hh_ref[...]
        gates = jnp.dot(h.astype(w.dtype), w,
                        preferred_element_type=jnp.float32) + gx

        # Gate slices land exactly on 128-lane boundaries (whole vregs), PyTorch order [i,f,g,o].
        i_g = jax.nn.sigmoid(gates[:, 0 * hp:1 * hp])
        f_g = jax.nn.sigmoid(gates[:, 1 * hp:2 * hp])
        g_g = jnp.tanh(gates[:, 2 * hp:3 * hp])
        o_g = jax.nn.sigmoid(gates[:, 3 * hp:4 * hp])

        c_new = f_g * c + i_g * g_g
        h_new = o_g * jnp.tanh(c_new)

        # Stash this timestep's hidden row (all 8 sublanes are replicas; keep row 0).
        hs_ref[pl.ds(t, 1), :] = h_new[0:1, :]
        return (h_new, c_new)

    h0 = jnp.zeros((8, hp), jnp.float32)
    c0 = jnp.zeros((8, hp), jnp.float32)
    unroll = seq_len if seq_len <= 16 else 4
    jax.lax.fori_loop(0, seq_len, step, (h0, c0), unroll=unroll)


def lstm_model_forward(x, w_ih, w_hh, b_ih, b_hh, w_lin, b_lin, *,
                       use_bf16_rnn_matmul=True):
    """x: (S, B, 1) float32.  Weights in PyTorch layout:
       w_ih (4H, 1), w_hh (4H, H), b_ih (4H,), b_hh (4H,), w_lin (1, H), b_lin (1,)."""
    S, B, _ = x.shape
    H = w_hh.shape[1]
    Sp = ((S + 7) // 8) * 8  # pad the timestep axis to a sublane multiple
    f32 = jnp.float32

    # ---- wrapper-side precompute / repacking (tiny XLA ops, off the serial path) ----
    # Only the last batch element feeds the output (lstm_out[:, -1, :]).
    x_last = x[:, B - 1, :].astype(f32)                    # (S, 1)
    bias = (b_ih + b_hh).astype(f32)                       # (4H,)
    gx = x_last @ w_ih.T.astype(f32) + bias                # (S, 4H), gate order [i, f, g, o]

    # Repack gates at 128-lane boundaries and zero-pad. Padded positions provably stay inert:
    # g = tanh(0) = 0 and c starts at 0, so padded c/h lanes remain exactly 0.
    gx_p = jnp.concatenate(
        [jnp.pad(gx[:, k * H:(k + 1) * H], ((0, Sp - S), (0, HP - H)))
         for k in range(4)], axis=1)                       # (Sp, 4*HP)

    w_hh_t = w_hh.T.astype(f32)                            # (H, 4H)
    w_hh_p = jnp.concatenate(
        [jnp.pad(w_hh_t[:, k * H:(k + 1) * H], ((0, HP - H), (0, HP - H)))
         for k in range(4)], axis=1)                       # (HP, 4*HP)
    if use_bf16_rnn_matmul:
        w_hh_p = w_hh_p.astype(jnp.bfloat16)

    kernel = functools.partial(_lstm_kernel, seq_len=S, hp=HP)

    # TODO(synk): for long sequences (S >~ 10k) add a time-chunk grid axis so gx / hs stream
    # through VMEM instead of being fully resident (v7x scoped-VMEM limit); irrelevant at S=8.
    hs = pl.pallas_call(
        kernel,
        out_shape=jax.ShapeDtypeStruct((Sp, HP), f32),
        grid=(1,),
        in_specs=[
            pl.BlockSpec((Sp, 4 * HP), lambda i: (0, 0)),   # precomputed x-projection (gate-aligned)
            pl.BlockSpec((HP, 4 * HP), lambda i: (0, 0)),   # W_hh^T (gate-aligned, padded, maybe bf16)
        ],
        out_specs=pl.BlockSpec((Sp, HP), lambda i: (0, 0)),  # lane-dense hidden-state slab
        compiler_params=pltpu.CompilerParams(
            dimension_semantics=("arbitrary",)),
    )(gx_p, w_hh_p)

    # Final Linear(100 -> 1) on the lane-dense hidden states; off the serial path, done by XLA.
    return hs[:S, :H] @ w_lin.T.astype(f32) + b_lin.astype(f32)


def lstm_model_reference(x, w_ih, w_hh, b_ih, b_hh, w_lin, b_lin):
    """Pure-JAX reference reproducing PyTorch semantics."""
    S, B, _ = x.shape
    H = w_hh.shape[1]

    def step(carry, x_t):
        h, c = carry
        gates = x_t @ w_ih.T + b_ih + h @ w_hh.T + b_hh
        i_g, f_g, g_g, o_g = jnp.split(gates, 4, axis=1)
        i_g = jax.nn.sigmoid(i_g)
        f_g = jax.nn.sigmoid(f_g)
        g_g = jnp.tanh(g_g)
        o_g = jax.nn.sigmoid(o_g)
        c = f_g * c + i_g * g_g
        h = o_g * jnp.tanh(c)
        return (h, c), h

    init = (jnp.zeros((B, H), jnp.float32), jnp.zeros((B, H), jnp.float32))
    _, hs = jax.lax.scan(step, init, x)          # hs: (S, B, H)
    last_out = hs[:, -1, :]                      # lstm_out[:, -1, :] -> (S, H)
    return last_out @ w_lin.T + b_lin            # (S, 1)


if __name__ == "__main__":
    S, B = 8, 2
    H = HIDDEN

    key = jax.random.PRNGKey(0)
    k_x, k1, k2, k3, k4, k5, k6 = jax.random.split(key, 7)

    # Deterministic synthetic parameters (PyTorch shapes).
    scale = 0.1
    w_ih = scale * jax.random.normal(k1, (4 * H, INPUT), jnp.float32)
    w_hh = scale * jax.random.normal(k2, (4 * H, H), jnp.float32)
    b_ih = scale * jax.random.normal(k3, (4 * H,), jnp.float32)
    b_hh = scale * jax.random.normal(k4, (4 * H,), jnp.float32)
    w_lin = scale * jax.random.normal(k5, (1, H), jnp.float32)
    b_lin = scale * jax.random.normal(k6, (1,), jnp.float32)

    x = jax.random.normal(k_x, (S, B, INPUT), jnp.float32)

    ref = lstm_model_reference(x, w_ih, w_hh, b_ih, b_hh, w_lin, b_lin)

    # Exact-parity f32 path.
    out_f32 = jax.block_until_ready(
        lstm_model_forward(x, w_ih, w_hh, b_ih, b_hh, w_lin, b_lin,
                           use_bf16_rnn_matmul=False))
    assert out_f32.shape == (S, 1), out_f32.shape
    assert jnp.allclose(out_f32, ref, atol=1e-5, rtol=1e-5), (out_f32, ref)

    # Default perf path: bf16 recurrent matmul, f32 accumulation (looser tolerance).
    out = jax.block_until_ready(
        lstm_model_forward(x, w_ih, w_hh, b_ih, b_hh, w_lin, b_lin))
    assert out.shape == (S, 1), out.shape
    assert jnp.allclose(out, ref, atol=5e-2, rtol=5e-2), (out, ref)

    print("KERNEL_OK")
</pallas_src>

<mosaic_0001>
module attributes {stable_mosaic.version = 11 : i64} {
  func.func @_lstm_kernel(%arg0: i32, %arg1: memref<8x512xf32, #tpu.memory_space<vmem>>, %arg2: memref<128x512xf32, #tpu.memory_space<vmem>>, %arg3: memref<8x128xf32, #tpu.memory_space<vmem>>) attributes {dimension_semantics = [#tpu.dimension_semantics<arbitrary>], iteration_bounds = array<i64: 1>, scalar_prefetch = 0 : i64, scratch_operands = 0 : i64, tpu.core_type = #tpu.core_type<tc>, window_params = [{pipeline_mode = #tpu.pipeline_mode<synchronous>, transform_indices = @transform_0, window_bounds = array<i64: 8, 512>}, {pipeline_mode = #tpu.pipeline_mode<synchronous>, transform_indices = @transform_1, window_bounds = array<i64: 128, 512>}, {pipeline_mode = #tpu.pipeline_mode<synchronous>, transform_indices = @transform_2, window_bounds = array<i64: 8, 128>}]} {
    %cst = arith.constant 0.000000e+00 : f32
    %0 = vector.broadcast %cst : f32 to vector<8x128xf32>
    %c0 = arith.constant 0 : index
    %c0_0 = arith.constant 0 : index
    %1 = vector.load %arg3[%c0, %c0_0] : memref<8x128xf32, #tpu.memory_space<vmem>>, vector<8x128xf32>
    tpu.vector_store %arg3[%c0, %c0_0], %0 {strides = array<i32>} : memref<8x128xf32, #tpu.memory_space<vmem>>, vector<8x128xf32>,
    %cst_1 = arith.constant 0.000000e+00 : f32
    %2 = vector.broadcast %cst_1 : f32 to vector<8x128xf32>
    %cst_2 = arith.constant 0.000000e+00 : f32
    %3 = vector.broadcast %cst_2 : f32 to vector<8x128xf32>
    %c0_i32 = arith.constant 0 : i32
    %4 = arith.index_cast %c0_i32 : i32 to index
    %c0_3 = arith.constant 0 : index
    %5 = vector.load %arg1[%4, %c0_3] : memref<8x512xf32, #tpu.memory_space<vmem>>, vector<1x512xf32>
    %c0_4 = arith.constant 0 : index
    %c0_5 = arith.constant 0 : index
    %6 = vector.load %arg2[%c0_4, %c0_5] : memref<128x512xf32, #tpu.memory_space<vmem>>, vector<128x512xf32>
    %cst_6 = arith.constant dense<0.000000e+00> : vector<8x512xf32>
    %7 = tpu.matmul %2, %6, %cst_6 {dimension_numbers = #tpu.dot_dimension_numbers<[1], [0], [0], [1], [0, 0, 1, 1], [], []>} : vector<8x128xf32>, vector<128x512xf32>, vector<8x512xf32> -> vector<8x512xf32>
    %8 = vector.broadcast %5 : vector<1x512xf32> to vector<8x512xf32>
    %9 = arith.addf %7, %8 : vector<8x512xf32>
    %10 = vector.extract_strided_slice %9 {offsets = [0, 0], sizes = [8, 128], strides = [1, 1]} : vector<8x512xf32> to vector<8x128xf32>
    %11 = arith.negf %10 : vector<8x128xf32>
    %12 = math.exp %11 : vector<8x128xf32>
    %cst_7 = arith.constant 1.000000e+00 : f32
    %13 = vector.broadcast %cst_7 : f32 to vector<8x128xf32>
    %14 = arith.addf %13, %12 : vector<8x128xf32>
    %15 = arith.divf %13, %14 : vector<8x128xf32>
    %16 = vector.extract_strided_slice %9 {offsets = [0, 128], sizes = [8, 128], strides = [1, 1]} : vector<8x512xf32> to vector<8x128xf32>
    %17 = arith.negf %16 : vector<8x128xf32>
    %18 = math.exp %17 : vector<8x128xf32>
    %cst_8 = arith.constant 1.000000e+00 : f32
    %19 = vector.broadcast %cst_8 : f32 to vector<8x128xf32>
    %20 = arith.addf %19, %18 : vector<8x128xf32>
    %21 = arith.divf %19, %20 : vector<8x128xf32>
    %22 = vector.extract_strided_slice %9 {offsets = [0, 256], sizes = [8, 128], strides = [1, 1]} : vector<8x512xf32> to vector<8x128xf32>
    %23 = math.tanh %22 : vector<8x128xf32>
    %24 = vector.extract_strided_slice %9 {offsets = [0, 384], sizes = [8, 128], strides = [1, 1]} : vector<8x512xf32> to vector<8x128xf32>
    %25 = arith.negf %24 : vector<8x128xf32>
    %26 = math.exp %25 : vector<8x128xf32>
    %cst_9 = arith.constant 1.000000e+00 : f32
    %27 = vector.broadcast %cst_9 : f32 to vector<8x128xf32>
    %28 = arith.addf %27, %26 : vector<8x128xf32>
    %29 = arith.divf %27, %28 : vector<8x128xf32>
    %30 = arith.mulf %21, %3 : vector<8x128xf32>
    %31 = arith.mulf %15, %23 : vector<8x128xf32>
    %32 = arith.addf %30, %31 : vector<8x128xf32>
    %33 = math.tanh %32 : vector<8x128xf32>
    %34 = arith.mulf %29, %33 : vector<8x128xf32>
    %35 = vector.extract_strided_slice %34 {offsets = [0, 0], sizes = [1, 128], strides = [1, 1]} : vector<8x128xf32> to vector<1x128xf32>
    %36 = arith.index_cast %c0_i32 : i32 to index
    %c0_10 = arith.constant 0 : index
    %37 = vector.load %arg3[%36, %c0_10] : memref<8x128xf32, #tpu.memory_space<vmem>>, vector<1x128xf32>
    tpu.vector_store %arg3[%36, %c0_10], %35 {strides = array<i32>} : memref<8x128xf32, #tpu.memory_space<vmem>>, vector<1x128xf32>,
    %c1_i32 = arith.constant 1 : i32
    %38 = arith.index_cast %c1_i32 : i32 to index
    %c0_11 = arith.constant 0 : index
    %39 = vector.load %arg1[%38, %c0_11] : memref<8x512xf32, #tpu.memory_space<vmem>>, vector<1x512xf32>
    %c0_12 = arith.constant 0 : index
    %c0_13 = arith.constant 0 : index
    %40 = vector.load %arg2[%c0_12, %c0_13] : memref<128x512xf32, #tpu.memory_space<vmem>>, vector<128x512xf32>
    %cst_14 = arith.constant dense<0.000000e+00> : vector<8x512xf32>
    %41 = tpu.matmul %34, %40, %cst_14 {dimension_numbers = #tpu.dot_dimension_numbers<[1], [0], [0], [1], [0, 0, 1, 1], [], []>} : vector<8x128xf32>, vector<128x512xf32>, vector<8x512xf32> -> vector<8x512xf32>
    %42 = vector.broadcast %39 : vector<1x512xf32> to vector<8x512xf32>
    %43 = arith.addf %41, %42 : vector<8x512xf32>
    %44 = vector.extract_strided_slice %43 {offsets = [0, 0], sizes = [8, 128], strides = [1, 1]} : vector<8x512xf32> to vector<8x128xf32>
    %45 = arith.negf %44 : vector<8x128xf32>
    %46 = math.exp %45 : vector<8x128xf32>
    %cst_15 = arith.constant 1.000000e+00 : f32
    %47 = vector.broadcast %cst_15 : f32 to vector<8x128xf32>
    %48 = arith.addf %47, %46 : vector<8x128xf32>
    %49 = arith.divf %47, %48 : vector<8x128xf32>
    %50 = vector.extract_strided_slice %43 {offsets = [0, 128], sizes = [8, 128], strides = [1, 1]} : vector<8x512xf32> to vector<8x128xf32>
    %51 = arith.negf %50 : vector<8x128xf32>
    %52 = math.exp %51 : vector<8x128xf32>
    %cst_16 = arith.constant 1.000000e+00 : f32
    %53 = vector.broadcast %cst_16 : f32 to vector<8x128xf32>
    %54 = arith.addf %53, %52 : vector<8x128xf32>
    %55 = arith.divf %53, %54 : vector<8x128xf32>
    %56 = vector.extract_strided_slice %43 {offsets = [0, 256], sizes = [8, 128], strides = [1, 1]} : vector<8x512xf32> to vector<8x128xf32>
    %57 = math.tanh %56 : vector<8x128xf32>
    %58 = vector.extract_strided_slice %43 {offsets = [0, 384], sizes = [8, 128], strides = [1, 1]} : vector<8x512xf32> to vector<8x128xf32>
    %59 = arith.negf %58 : vector<8x128xf32>
    %60 = math.exp %59 : vector<8x128xf32>
    %cst_17 = arith.constant 1.000000e+00 : f32
    %61 = vector.broadcast %cst_17 : f32 to vector<8x128xf32>
    %62 = arith.addf %61, %60 : vector<8x128xf32>
    %63 = arith.divf %61, %62 : vector<8x128xf32>
    %64 = arith.mulf %55, %32 : vector<8x128xf32>
    %65 = arith.mulf %49, %57 : vector<8x128xf32>
    %66 = arith.addf %64, %65 : vector<8x128xf32>
    %67 = math.tanh %66 : vector<8x128xf32>
    %68 = arith.mulf %63, %67 : vector<8x128xf32>
    %69 = vector.extract_strided_slice %68 {offsets = [0, 0], sizes = [1, 128], strides = [1, 1]} : vector<8x128xf32> to vector<1x128xf32>
    %70 = arith.index_cast %c1_i32 : i32 to index
    %c0_18 = arith.constant 0 : index
    %71 = vector.load %arg3[%70, %c0_18] : memref<8x128xf32, #tpu.memory_space<vmem>>, vector<1x128xf32>
    tpu.vector_store %arg3[%70, %c0_18], %69 {strides = array<i32>} : memref<8x128xf32, #tpu.memory_space<vmem>>, vector<1x128xf32>,
    %c2_i32 = arith.constant 2 : i32
    %72 = arith.index_cast %c2_i32 : i32 to index
    %c0_19 = arith.constant 0 : index
    %73 = vector.load %arg1[%72, %c0_19] : memref<8x512xf32, #tpu.memory_space<vmem>>, vector<1x512xf32>
    %c0_20 = arith.constant 0 : index
    %c0_21 = arith.constant 0 : index
    %74 = vector.load %arg2[%c0_20, %c0_21] : memref<128x512xf32, #tpu.memory_space<vmem>>, vector<128x512xf32>
    %cst_22 = arith.constant dense<0.000000e+00> : vector<8x512xf32>
    %75 = tpu.matmul %68, %74, %cst_22 {dimension_numbers = #tpu.dot_dimension_numbers<[1], [0], [0], [1], [0, 0, 1, 1], [], []>} : vector<8x128xf32>, vector<128x512xf32>, vector<8x512xf32> -> vector<8x512xf32>
    %76 = vector.broadcast %73 : vector<1x512xf32> to vector<8x512xf32>
    %77 = arith.addf %75, %76 : vector<8x512xf32>
    %78 = vector.extract_strided_slice %77 {offsets = [0, 0], sizes = [8, 128], strides = [1, 1]} : vector<8x512xf32> to vector<8x128xf32>
    %79 = arith.negf %78 : vector<8x128xf32>
    %80 = math.exp %79 : vector<8x128xf32>
    %cst_23 = arith.constant 1.000000e+00 : f32
    %81 = vector.broadcast %cst_23 : f32 to vector<8x128xf32>
    %82 = arith.addf %81, %80 : vector<8x128xf32>
    %83 = arith.divf %81, %82 : vector<8x128xf32>
    %84 = vector.extract_strided_slice %77 {offsets = [0, 128], sizes = [8, 128], strides = [1, 1]} : vector<8x512xf32> to vector<8x128xf32>
    %85 = arith.negf %84 : vector<8x128xf32>
    %86 = math.exp %85 : vector<8x128xf32>
    %cst_24 = arith.constant 1.000000e+00 : f32
    %87 = vector.broadcast %cst_24 : f32 to vector<8x128xf32>
    %88 = arith.addf %87, %86 : vector<8x128xf32>
    %89 = arith.divf %87, %88 : vector<8x128xf32>
    %90 = vector.extract_strided_slice %77 {offsets = [0, 256], sizes = [8, 128], strides = [1, 1]} : vector<8x512xf32> to vector<8x128xf32>
    %91 = math.tanh %90 : vector<8x128xf32>
    %92 = vector.extract_strided_slice %77 {offsets = [0, 384], sizes = [8, 128], strides = [1, 1]} : vector<8x512xf32> to vector<8x128xf32>
    %93 = arith.negf %92 : vector<8x128xf32>
    %94 = math.exp %93 : vector<8x128xf32>
    %cst_25 = arith.constant 1.000000e+00 : f32
    %95 = vector.broadcast %cst_25 : f32 to vector<8x128xf32>
    %96 = arith.addf %95, %94 : vector<8x128xf32>
    %97 = arith.divf %95, %96 : vector<8x128xf32>
    %98 = arith.mulf %89, %66 : vector<8x128xf32>
    %99 = arith.mulf %83, %91 : vector<8x128xf32>
    %100 = arith.addf %98, %99 : vector<8x128xf32>
    %101 = math.tanh %100 : vector<8x128xf32>
    %102 = arith.mulf %97, %101 : vector<8x128xf32>
    %103 = vector.extract_strided_slice %102 {offsets = [0, 0], sizes = [1, 128], strides = [1, 1]} : vector<8x128xf32> to vector<1x128xf32>
    %104 = arith.index_cast %c2_i32 : i32 to index
    %c0_26 = arith.constant 0 : index
    %105 = vector.load %arg3[%104, %c0_26] : memref<8x128xf32, #tpu.memory_space<vmem>>, vector<1x128xf32>
    tpu.vector_store %arg3[%104, %c0_26], %103 {strides = array<i32>} : memref<8x128xf32, #tpu.memory_space<vmem>>, vector<1x128xf32>,
    %c3_i32 = arith.constant 3 : i32
    %106 = arith.index_cast %c3_i32 : i32 to index
    %c0_27 = arith.constant 0 : index
    %107 = vector.load %arg1[%106, %c0_27] : memref<8x512xf32, #tpu.memory_space<vmem>>, vector<1x512xf32>
    %c0_28 = arith.constant 0 : index
    %c0_29 = arith.constant 0 : index
    %108 = vector.load %arg2[%c0_28, %c0_29] : memref<128x512xf32, #tpu.memory_space<vmem>>, vector<128x512xf32>
    %cst_30 = arith.constant dense<0.000000e+00> : vector<8x512xf32>
    %109 = tpu.matmul %102, %108, %cst_30 {dimension_numbers = #tpu.dot_dimension_numbers<[1], [0], [0], [1], [0, 0, 1, 1], [], []>} : vector<8x128xf32>, vector<128x512xf32>, vector<8x512xf32> -> vector<8x512xf32>
    %110 = vector.broadcast %107 : vector<1x512xf32> to vector<8x512xf32>
    %111 = arith.addf %109, %110 : vector<8x512xf32>
    %112 = vector.extract_strided_slice %111 {offsets = [0, 0], sizes = [8, 128], strides = [1, 1]} : vector<8x512xf32> to vector<8x128xf32>
    %113 = arith.negf %112 : vector<8x128xf32>
    %114 = math.exp %113 : vector<8x128xf32>
    %cst_31 = arith.constant 1.000000e+00 : f32
    %115 = vector.broadcast %cst_31 : f32 to vector<8x128xf32>
    %116 = arith.addf %115, %114 : vector<8x128xf32>
    %117 = arith.divf %115, %116 : vector<8x128xf32>
    %118 = vector.extract_strided_slice %111 {offsets = [0, 128], sizes = [8, 128], strides = [1, 1]} : vector<8x512xf32> to vector<8x128xf32>
    %119 = arith.negf %118 : vector<8x128xf32>
    %120 = math.exp %119 : vector<8x128xf32>
    %cst_32 = arith.constant 1.000000e+00 : f32
    %121 = vector.broadcast %cst_32 : f32 to vector<8x128xf32>
    %122 = arith.addf %121, %120 : vector<8x128xf32>
    %123 = arith.divf %121, %122 : vector<8x128xf32>
    %124 = vector.extract_strided_slice %111 {offsets = [0, 256], sizes = [8, 128], strides = [1, 1]} : vector<8x512xf32> to vector<8x128xf32>
    %125 = math.tanh %124 : vector<8x128xf32>
    %126 = vector.extract_strided_slice %111 {offsets = [0, 384], sizes = [8, 128], strides = [1, 1]} : vector<8x512xf32> to vector<8x128xf32>
    %127 = arith.negf %126 : vector<8x128xf32>
    %128 = math.exp %127 : vector<8x128xf32>
    %cst_33 = arith.constant 1.000000e+00 : f32
    %129 = vector.broadcast %cst_33 : f32 to vector<8x128xf32>
    %130 = arith.addf %129, %128 : vector<8x128xf32>
    %131 = arith.divf %129, %130 : vector<8x128xf32>
    %132 = arith.mulf %123, %100 : vector<8x128xf32>
    %133 = arith.mulf %117, %125 : vector<8x128xf32>
    %134 = arith.addf %132, %133 : vector<8x128xf32>
    %135 = math.tanh %134 : vector<8x128xf32>
    %136 = arith.mulf %131, %135 : vector<8x128xf32>
    %137 = vector.extract_strided_slice %136 {offsets = [0, 0], sizes = [1, 128], strides = [1, 1]} : vector<8x128xf32> to vector<1x128xf32>
    %138 = arith.index_cast %c3_i32 : i32 to index
    %c0_34 = arith.constant 0 : index
    %139 = vector.load %arg3[%138, %c0_34] : memref<8x128xf32, #tpu.memory_space<vmem>>, vector<1x128xf32>
    tpu.vector_store %arg3[%138, %c0_34], %137 {strides = array<i32>} : memref<8x128xf32, #tpu.memory_space<vmem>>, vector<1x128xf32>,
    %c4_i32 = arith.constant 4 : i32
    %140 = arith.index_cast %c4_i32 : i32 to index
    %c0_35 = arith.constant 0 : index
    %141 = vector.load %arg1[%140, %c0_35] : memref<8x512xf32, #tpu.memory_space<vmem>>, vector<1x512xf32>
    %c0_36 = arith.constant 0 : index
    %c0_37 = arith.constant 0 : index
    %142 = vector.load %arg2[%c0_36, %c0_37] : memref<128x512xf32, #tpu.memory_space<vmem>>, vector<128x512xf32>
    %cst_38 = arith.constant dense<0.000000e+00> : vector<8x512xf32>
    %143 = tpu.matmul %136, %142, %cst_38 {dimension_numbers = #tpu.dot_dimension_numbers<[1], [0], [0], [1], [0, 0, 1, 1], [], []>} : vector<8x128xf32>, vector<128x512xf32>, vector<8x512xf32> -> vector<8x512xf32>
    %144 = vector.broadcast %141 : vector<1x512xf32> to vector<8x512xf32>
    %145 = arith.addf %143, %144 : vector<8x512xf32>
    %146 = vector.extract_strided_slice %145 {offsets = [0, 0], sizes = [8, 128], strides = [1, 1]} : vector<8x512xf32> to vector<8x128xf32>
    %147 = arith.negf %146 : vector<8x128xf32>
    %148 = math.exp %147 : vector<8x128xf32>
    %cst_39 = arith.constant 1.000000e+00 : f32
    %149 = vector.broadcast %cst_39 : f32 to vector<8x128xf32>
    %150 = arith.addf %149, %148 : vector<8x128xf32>
    %151 = arith.divf %149, %150 : vector<8x128xf32>
    %152 = vector.extract_strided_slice %145 {offsets = [0, 128], sizes = [8, 128], strides = [1, 1]} : vector<8x512xf32> to vector<8x128xf32>
    %153 = arith.negf %152 : vector<8x128xf32>
    %154 = math.exp %153 : vector<8x128xf32>
    %cst_40 = arith.constant 1.000000e+00 : f32
    %155 = vector.broadcast %cst_40 : f32 to vector<8x128xf32>
    %156 = arith.addf %155, %154 : vector<8x128xf32>
    %157 = arith.divf %155, %156 : vector<8x128xf32>
    %158 = vector.extract_strided_slice %145 {offsets = [0, 256], sizes = [8, 128], strides = [1, 1]} : vector<8x512xf32> to vector<8x128xf32>
    %159 = math.tanh %158 : vector<8x128xf32>
    %160 = vector.extract_strided_slice %145 {offsets = [0, 384], sizes = [8, 128], strides = [1, 1]} : vector<8x512xf32> to vector<8x128xf32>
    %161 = arith.negf %160 : vector<8x128xf32>
    %162 = math.exp %161 : vector<8x128xf32>
    %cst_41 = arith.constant 1.000000e+00 : f32
    %163 = vector.broadcast %cst_41 : f32 to vector<8x128xf32>
    %164 = arith.addf %163, %162 : vector<8x128xf32>
    %165 = arith.divf %163, %164 : vector<8x128xf32>
    %166 = arith.mulf %157, %134 : vector<8x128xf32>
    %167 = arith.mulf %151, %159 : vector<8x128xf32>
    %168 = arith.addf %166, %167 : vector<8x128xf32>
    %169 = math.tanh %168 : vector<8x128xf32>
    %170 = arith.mulf %165, %169 : vector<8x128xf32>
    %171 = vector.extract_strided_slice %170 {offsets = [0, 0], sizes = [1, 128], strides = [1, 1]} : vector<8x128xf32> to vector<1x128xf32>
    %172 = arith.index_cast %c4_i32 : i32 to index
    %c0_42 = arith.constant 0 : index
    %173 = vector.load %arg3[%172, %c0_42] : memref<8x128xf32, #tpu.memory_space<vmem>>, vector<1x128xf32>
    tpu.vector_store %arg3[%172, %c0_42], %171 {strides = array<i32>} : memref<8x128xf32, #tpu.memory_space<vmem>>, vector<1x128xf32>,
    %c5_i32 = arith.constant 5 : i32
    %174 = arith.index_cast %c5_i32 : i32 to index
    %c0_43 = arith.constant 0 : index
    %175 = vector.load %arg1[%174, %c0_43] : memref<8x512xf32, #tpu.memory_space<vmem>>, vector<1x512xf32>
    %c0_44 = arith.constant 0 : index
    %c0_45 = arith.constant 0 : index
    %176 = vector.load %arg2[%c0_44, %c0_45] : memref<128x512xf32, #tpu.memory_space<vmem>>, vector<128x512xf32>
    %cst_46 = arith.constant dense<0.000000e+00> : vector<8x512xf32>
    %177 = tpu.matmul %170, %176, %cst_46 {dimension_numbers = #tpu.dot_dimension_numbers<[1], [0], [0], [1], [0, 0, 1, 1], [], []>} : vector<8x128xf32>, vector<128x512xf32>, vector<8x512xf32> -> vector<8x512xf32>
    %178 = vector.broadcast %175 : vector<1x512xf32> to vector<8x512xf32>
    %179 = arith.addf %177, %178 : vector<8x512xf32>
    %180 = vector.extract_strided_slice %179 {offsets = [0, 0], sizes = [8, 128], strides = [1, 1]} : vector<8x512xf32> to vector<8x128xf32>
    %181 = arith.negf %180 : vector<8x128xf32>
    %182 = math.exp %181 : vector<8x128xf32>
    %cst_47 = arith.constant 1.000000e+00 : f32
    %183 = vector.broadcast %cst_47 : f32 to vector<8x128xf32>
    %184 = arith.addf %183, %182 : vector<8x128xf32>
    %185 = arith.divf %183, %184 : vector<8x128xf32>
    %186 = vector.extract_strided_slice %179 {offsets = [0, 128], sizes = [8, 128], strides = [1, 1]} : vector<8x512xf32> to vector<8x128xf32>
    %187 = arith.negf %186 : vector<8x128xf32>
    %188 = math.exp %187 : vector<8x128xf32>
    %cst_48 = arith.constant 1.000000e+00 : f32
    %189 = vector.broadcast %cst_48 : f32 to vector<8x128xf32>
    %190 = arith.addf %189, %188 : vector<8x128xf32>
    %191 = arith.divf %189, %190 : vector<8x128xf32>
    %192 = vector.extract_strided_slice %179 {offsets = [0, 256], sizes = [8, 128], strides = [1, 1]} : vector<8x512xf32> to vector<8x128xf32>
    %193 = math.tanh %192 : vector<8x128xf32>
    %194 = vector.extract_strided_slice %179 {offsets = [0, 384], sizes = [8, 128], strides = [1, 1]} : vector<8x512xf32> to vector<8x128xf32>
    %195 = arith.negf %194 : vector<8x128xf32>
    %196 = math.exp %195 : vector<8x128xf32>
    %cst_49 = arith.constant 1.000000e+00 : f32
    %197 = vector.broadcast %cst_49 : f32 to vector<8x128xf32>
    %198 = arith.addf %197, %196 : vector<8x128xf32>
    %199 = arith.divf %197, %198 : vector<8x128xf32>
    %200 = arith.mulf %191, %168 : vector<8x128xf32>
    %201 = arith.mulf %185, %193 : vector<8x128xf32>
    %202 = arith.addf %200, %201 : vector<8x128xf32>
    %203 = math.tanh %202 : vector<8x128xf32>
    %204 = arith.mulf %199, %203 : vector<8x128xf32>
    %205 = vector.extract_strided_slice %204 {offsets = [0, 0], sizes = [1, 128], strides = [1, 1]} : vector<8x128xf32> to vector<1x128xf32>
    %206 = arith.index_cast %c5_i32 : i32 to index
    %c0_50 = arith.constant 0 : index
    %207 = vector.load %arg3[%206, %c0_50] : memref<8x128xf32, #tpu.memory_space<vmem>>, vector<1x128xf32>
    tpu.vector_store %arg3[%206, %c0_50], %205 {strides = array<i32>} : memref<8x128xf32, #tpu.memory_space<vmem>>, vector<1x128xf32>,
    %c6_i32 = arith.constant 6 : i32
    %208 = arith.index_cast %c6_i32 : i32 to index
    %c0_51 = arith.constant 0 : index
    %209 = vector.load %arg1[%208, %c0_51] : memref<8x512xf32, #tpu.memory_space<vmem>>, vector<1x512xf32>
    %c0_52 = arith.constant 0 : index
    %c0_53 = arith.constant 0 : index
    %210 = vector.load %arg2[%c0_52, %c0_53] : memref<128x512xf32, #tpu.memory_space<vmem>>, vector<128x512xf32>
    %cst_54 = arith.constant dense<0.000000e+00> : vector<8x512xf32>
    %211 = tpu.matmul %204, %210, %cst_54 {dimension_numbers = #tpu.dot_dimension_numbers<[1], [0], [0], [1], [0, 0, 1, 1], [], []>} : vector<8x128xf32>, vector<128x512xf32>, vector<8x512xf32> -> vector<8x512xf32>
    %212 = vector.broadcast %209 : vector<1x512xf32> to vector<8x512xf32>
    %213 = arith.addf %211, %212 : vector<8x512xf32>
    %214 = vector.extract_strided_slice %213 {offsets = [0, 0], sizes = [8, 128], strides = [1, 1]} : vector<8x512xf32> to vector<8x128xf32>
    %215 = arith.negf %214 : vector<8x128xf32>
    %216 = math.exp %215 : vector<8x128xf32>
    %cst_55 = arith.constant 1.000000e+00 : f32
    %217 = vector.broadcast %cst_55 : f32 to vector<8x128xf32>
    %218 = arith.addf %217, %216 : vector<8x128xf32>
    %219 = arith.divf %217, %218 : vector<8x128xf32>
    %220 = vector.extract_strided_slice %213 {offsets = [0, 128], sizes = [8, 128], strides = [1, 1]} : vector<8x512xf32> to vector<8x128xf32>
    %221 = arith.negf %220 : vector<8x128xf32>
    %222 = math.exp %221 : vector<8x128xf32>
    %cst_56 = arith.constant 1.000000e+00 : f32
    %223 = vector.broadcast %cst_56 : f32 to vector<8x128xf32>
    %224 = arith.addf %223, %222 : vector<8x128xf32>
    %225 = arith.divf %223, %224 : vector<8x128xf32>
    %226 = vector.extract_strided_slice %213 {offsets = [0, 256], sizes = [8, 128], strides = [1, 1]} : vector<8x512xf32> to vector<8x128xf32>
    %227 = math.tanh %226 : vector<8x128xf32>
    %228 = vector.extract_strided_slice %213 {offsets = [0, 384], sizes = [8, 128], strides = [1, 1]} : vector<8x512xf32> to vector<8x128xf32>
    %229 = arith.negf %228 : vector<8x128xf32>
    %230 = math.exp %229 : vector<8x128xf32>
    %cst_57 = arith.constant 1.000000e+00 : f32
    %231 = vector.broadcast %cst_57 : f32 to vector<8x128xf32>
    %232 = arith.addf %231, %230 : vector<8x128xf32>
    %233 = arith.divf %231, %232 : vector<8x128xf32>
    %234 = arith.mulf %225, %202 : vector<8x128xf32>
    %235 = arith.mulf %219, %227 : vector<8x128xf32>
    %236 = arith.addf %234, %235 : vector<8x128xf32>
    %237 = math.tanh %236 : vector<8x128xf32>
    %238 = arith.mulf %233, %237 : vector<8x128xf32>
    %239 = vector.extract_strided_slice %238 {offsets = [0, 0], sizes = [1, 128], strides = [1, 1]} : vector<8x128xf32> to vector<1x128xf32>
    %240 = arith.index_cast %c6_i32 : i32 to index
    %c0_58 = arith.constant 0 : index
    %241 = vector.load %arg3[%240, %c0_58] : memref<8x128xf32, #tpu.memory_space<vmem>>, vector<1x128xf32>
    tpu.vector_store %arg3[%240, %c0_58], %239 {strides = array<i32>} : memref<8x128xf32, #tpu.memory_space<vmem>>, vector<1x128xf32>,
    %c7_i32 = arith.constant 7 : i32
    %242 = arith.index_cast %c7_i32 : i32 to index
    %c0_59 = arith.constant 0 : index
    %243 = vector.load %arg1[%242, %c0_59] : memref<8x512xf32, #tpu.memory_space<vmem>>, vector<1x512xf32>
    %c0_60 = arith.constant 0 : index
    %c0_61 = arith.constant 0 : index
    %244 = vector.load %arg2[%c0_60, %c0_61] : memref<128x512xf32, #tpu.memory_space<vmem>>, vector<128x512xf32>
    %cst_62 = arith.constant dense<0.000000e+00> : vector<8x512xf32>
    %245 = tpu.matmul %238, %244, %cst_62 {dimension_numbers = #tpu.dot_dimension_numbers<[1], [0], [0], [1], [0, 0, 1, 1], [], []>} : vector<8x128xf32>, vector<128x512xf32>, vector<8x512xf32> -> vector<8x512xf32>
    %246 = vector.broadcast %243 : vector<1x512xf32> to vector<8x512xf32>
    %247 = arith.addf %245, %246 : vector<8x512xf32>
    %248 = vector.extract_strided_slice %247 {offsets = [0, 0], sizes = [8, 128], strides = [1, 1]} : vector<8x512xf32> to vector<8x128xf32>
    %249 = arith.negf %248 : vector<8x128xf32>
    %250 = math.exp %249 : vector<8x128xf32>
    %cst_63 = arith.constant 1.000000e+00 : f32
    %251 = vector.broadcast %cst_63 : f32 to vector<8x128xf32>
    %252 = arith.addf %251, %250 : vector<8x128xf32>
    %253 = arith.divf %251, %252 : vector<8x128xf32>
    %254 = vector.extract_strided_slice %247 {offsets = [0, 128], sizes = [8, 128], strides = [1, 1]} : vector<8x512xf32> to vector<8x128xf32>
    %255 = arith.negf %254 : vector<8x128xf32>
    %256 = math.exp %255 : vector<8x128xf32>
    %cst_64 = arith.constant 1.000000e+00 : f32
    %257 = vector.broadcast %cst_64 : f32 to vector<8x128xf32>
    %258 = arith.addf %257, %256 : vector<8x128xf32>
    %259 = arith.divf %257, %258 : vector<8x128xf32>
    %260 = vector.extract_strided_slice %247 {offsets = [0, 256], sizes = [8, 128], strides = [1, 1]} : vector<8x512xf32> to vector<8x128xf32>
    %261 = math.tanh %260 : vector<8x128xf32>
    %262 = vector.extract_strided_slice %247 {offsets = [0, 384], sizes = [8, 128], strides = [1, 1]} : vector<8x512xf32> to vector<8x128xf32>
    %263 = arith.negf %262 : vector<8x128xf32>
    %264 = math.exp %263 : vector<8x128xf32>
    %cst_65 = arith.constant 1.000000e+00 : f32
    %265 = vector.broadcast %cst_65 : f32 to vector<8x128xf32>
    %266 = arith.addf %265, %264 : vector<8x128xf32>
    %267 = arith.divf %265, %266 : vector<8x128xf32>
    %268 = arith.mulf %259, %236 : vector<8x128xf32>
    %269 = arith.mulf %253, %261 : vector<8x128xf32>
    %270 = arith.addf %268, %269 : vector<8x128xf32>
    %271 = math.tanh %270 : vector<8x128xf32>
    %272 = arith.mulf %267, %271 : vector<8x128xf32>
    %273 = vector.extract_strided_slice %272 {offsets = [0, 0], sizes = [1, 128], strides = [1, 1]} : vector<8x128xf32> to vector<1x128xf32>
    %274 = arith.index_cast %c7_i32 : i32 to index
    %c0_66 = arith.constant 0 : index
    %275 = vector.load %arg3[%274, %c0_66] : memref<8x128xf32, #tpu.memory_space<vmem>>, vector<1x128xf32>
    tpu.vector_store %arg3[%274, %c0_66], %273 {strides = array<i32>} : memref<8x128xf32, #tpu.memory_space<vmem>>, vector<1x128xf32>,
    %c8_i32 = arith.constant 8 : i32
    return
  }
  func.func @transform_0(%arg0: i32) -> (i32, i32) {
    %c0_i32 = arith.constant 0 : i32
    %c0_i32_0 = arith.constant 0 : i32
    %c0_i32_1 = arith.constant 0 : i32
    return %c0_i32, %c0_i32_0 : i32, i32
  }
  func.func @transform_1(%arg0: i32) -> (i32, i32) {
    %c0_i32 = arith.constant 0 : i32
    %c0_i32_0 = arith.constant 0 : i32
    %c0_i32_1 = arith.constant 0 : i32
    return %c0_i32, %c0_i32_0 : i32, i32
  }
  func.func @transform_2(%arg0: i32) -> (i32, i32) {
    %c0_i32 = arith.constant 0 : i32
    %c0_i32_0 = arith.constant 0 : i32
    %c0_i32_1 = arith.constant 0 : i32
    return %c0_i32, %c0_i32_0 : i32, i32
  }
}

</mosaic_0001>

<llo_original>
// kernel: tpu_custom_call.1
$region0: #{tpu_custom_call.1}
  #allocation0 [shape = 'u32[]', space=smem, size = 0x4, offset = 0x4, fixed_abs, tag = 'smem constant byte address 0x4 - core index']
  #allocation1 [shape = 'u32[144,128]{1,0:T(1,128)}', space=vmem, size = 0x12000, scoped, tag = 'internal scratch']
  %s0 = inlined_call_operand.hbm [shape: f32[8,512], index: 0, kind: input, shape index: {}]
  %s1 = inlined_call_operand.hbm [shape: f32[128,512], index: 1, kind: input, shape index: {}]
  %s2 = inlined_call_operand.hbm [shape: f32[8,128], index: 2, kind: output, shape index: {}]
  %s3 = sld [smem:[#allocation0]]
  $region26: #{tpu_custom_call.1} parent=0
    _
  %s5 = ssub.s32 1, %s3
  %s6 = scalar_select 0, %s5, %s3
  $region1: #{tpu_custom_call.1} parent=0
    #allocation2 [shape = 'u8[16384]{0}', space=vmem, size = 0x4000, scoped, tag = 'input window, operand 0, single buffered']
    #allocation3 [shape = 's32[1]{0}', space=sflag, size = 0x4, scoped, tag = 'scoped memory for tpu_custom_call.1']
    #allocation4 [shape = 's32[1]{0}', space=sflag, size = 0x4, scoped, tag = 'scoped memory for tpu_custom_call.1']
    #allocation5 [shape = 'u8[262144]{0}', space=vmem, size = 0x40000, scoped, tag = 'input window, operand 1, single buffered']
    #allocation6 [shape = 's32[1]{0}', space=sflag, size = 0x4, scoped, tag = 'scoped memory for tpu_custom_call.1']
    #allocation7 [shape = 'u8[4096]{0}', space=vmem, size = 0x1000, scoped, tag = 'output window, operand 0, single buffered']
    %7 = vsyncpa [#allocation3], 0
    %8 = vsyncpa [#allocation6], 0
    %9 = vsyncpa [#allocation4], 0
    // Predicated region
    $region2: #{tpu_custom_call.1} parent=1 // pred_check
      _
    $region3: #{tpu_custom_call.1} parent=1 // pred_check_branch
      %11 = sbr.rel (0) target = $region5
    $region4: #{tpu_custom_call.1} parent=1 // pred_region
      %s13 = ssub.s32 512, 512
      %14 = vsyncadd [#allocation3], %s13
      %s16 = sshll.u32 [#allocation2], 4
      %s17 = int_to_ptr.vmem [resolvable:$true] %s16
      %19 = dma.hbm_to_vmem [thread:$0]  %s0, 512, %s17, [#allocation3]
    $region5: #{tpu_custom_call.1} parent=1 // pred_fallthru
      _
    // Predicated region
    $region6: #{tpu_custom_call.1} parent=1 // pred_check
      _
    $region7: #{tpu_custom_call.1} parent=1 // pred_check_branch
      %21 = sbr.rel (0) target = $region9
    $region8: #{tpu_custom_call.1} parent=1 // pred_region
      %s23 = ssub.s32 8192, 8192
      %24 = vsyncadd [#allocation6], %s23
      %s25 = sshll.u32 [#allocation5], 4
      %s26 = int_to_ptr.vmem [resolvable:$true] %s25
      %31 = dma.hbm_to_vmem [thread:$0]  %s1, 8192, %s26, [#allocation6], 512, 512, 32
    $region9: #{tpu_custom_call.1} parent=1 // pred_fallthru
      _
    // Predicated region
    $region10: #{tpu_custom_call.1} parent=1 // pred_check
      _
    $region11: #{tpu_custom_call.1} parent=1 // pred_check_branch
      %33 = sbr.rel (0) target = $region13
    $region12: #{tpu_custom_call.1} parent=1 // pred_region
      %34 = dma.done [#allocation3], 512
    $region13: #{tpu_custom_call.1} parent=1 // pred_fallthru
      _
    // Predicated region
    $region14: #{tpu_custom_call.1} parent=1 // pred_check
      _
    $region15: #{tpu_custom_call.1} parent=1 // pred_check_branch
      %36 = sbr.rel (0) target = $region17
    $region16: #{tpu_custom_call.1} parent=1 // pred_region
      %37 = dma.done [#allocation6], 8192
    $region17: #{tpu_custom_call.1} parent=1 // pred_fallthru
      _
    %38 = vst [vmem:[#allocation7] sm:$0xff] 0.0
    %v39 = vld [vmem:[#allocation2] ss:$8 sm:$0xf]
    %v40 = vld [vmem:[#allocation5] sm:$0xff]
    %v41 = vld [vmem:[#allocation5 + $0x8] sm:$0xff]
    %v42 = vld [vmem:[#allocation5 + $0x10] sm:$0xff]
    %v43 = vld [vmem:[#allocation5 + $0x18] sm:$0xff]
    %v44 = vld [vmem:[#allocation5 + $0x20] sm:$0xff]
    %v45 = vld [vmem:[#allocation5 + $0x28] sm:$0xff]
    %v46 = vld [vmem:[#allocation5 + $0x30] sm:$0xff]
    %v47 = vld [vmem:[#allocation5 + $0x38] sm:$0xff]
    %v48 = vld [vmem:[#allocation5 + $0x40] sm:$0xff]
    %v49 = vld [vmem:[#allocation5 + $0x48] sm:$0xff]
    %v50 = vld [vmem:[#allocation5 + $0x50] sm:$0xff]
    %v51 = vld [vmem:[#allocation5 + $0x58] sm:$0xff]
    %v52 = vld [vmem:[#allocation5 + $0x60] sm:$0xff]
    %v53 = vld [vmem:[#allocation5 + $0x68] sm:$0xff]
    %v54 = vld [vmem:[#allocation5 + $0x70] sm:$0xff]
    %v55 = vld [vmem:[#allocation5 + $0x78] sm:$0xff]
    %v56 = vld [vmem:[#allocation5 + $0x80] sm:$0xff]
    %v57 = vld [vmem:[#allocation5 + $0x88] sm:$0xff]
    %v58 = vld [vmem:[#allocation5 + $0x90] sm:$0xff]
    %v59 = vld [vmem:[#allocation5 + $0x98] sm:$0xff]
    %v60 = vld [vmem:[#allocation5 + $0xa0] sm:$0xff]
    %v61 = vld [vmem:[#allocation5 + $0xa8] sm:$0xff]
    %v62 = vld [vmem:[#allocation5 + $0xb0] sm:$0xff]
    %v63 = vld [vmem:[#allocation5 + $0xb8] sm:$0xff]
    %v64 = vld [vmem:[#allocation5 + $0xc0] sm:$0xff]
    %v65 = vld [vmem:[#allocation5 + $0xc8] sm:$0xff]
    %v66 = vld [vmem:[#allocation5 + $0xd0] sm:$0xff]
    %v67 = vld [vmem:[#allocation5 + $0xd8] sm:$0xff]
    %v68 = vld [vmem:[#allocation5 + $0xe0] sm:$0xff]
    %v69 = vld [vmem:[#allocation5 + $0xe8] sm:$0xff]
    %v70 = vld [vmem:[#allocation5 + $0xf0] sm:$0xff]
    %v71 = vld [vmem:[#allocation5 + $0xf8] sm:$0xff]
    %v72 = vld [vmem:[#allocation5 + $0x100] sm:$0xff]
    %v73 = vld [vmem:[#allocation5 + $0x108] sm:$0xff]
    %v74 = vld [vmem:[#allocation5 + $0x110] sm:$0xff]
    %v75 = vld [vmem:[#allocation5 + $0x118] sm:$0xff]
    %v76 = vld [vmem:[#allocation5 + $0x120] sm:$0xff]
    %v77 = vld [vmem:[#allocation5 + $0x128] sm:$0xff]
    %v78 = vld [vmem:[#allocation5 + $0x130] sm:$0xff]
    %v79 = vld [vmem:[#allocation5 + $0x138] sm:$0xff]
    %v80 = vld [vmem:[#allocation5 + $0x140] sm:$0xff]
    %v81 = vld [vmem:[#allocation5 + $0x148] sm:$0xff]
    %v82 = vld [vmem:[#allocation5 + $0x150] sm:$0xff]
    %v83 = vld [vmem:[#allocation5 + $0x158] sm:$0xff]
    %v84 = vld [vmem:[#allocation5 + $0x160] sm:$0xff]
    %v85 = vld [vmem:[#allocation5 + $0x168] sm:$0xff]
    %v86 = vld [vmem:[#allocation5 + $0x170] sm:$0xff]
    %v87 = vld [vmem:[#allocation5 + $0x178] sm:$0xff]
    %v88 = vld [vmem:[#allocation5 + $0x180] sm:$0xff]
    %v89 = vld [vmem:[#allocation5 + $0x188] sm:$0xff]
    %v90 = vld [vmem:[#allocation5 + $0x190] sm:$0xff]
    %v91 = vld [vmem:[#allocation5 + $0x198] sm:$0xff]
    %v92 = vld [vmem:[#allocation5 + $0x1a0] sm:$0xff]
    %v93 = vld [vmem:[#allocation5 + $0x1a8] sm:$0xff]
    %v94 = vld [vmem:[#allocation5 + $0x1b0] sm:$0xff]
    %v95 = vld [vmem:[#allocation5 + $0x1b8] sm:$0xff]
    %v96 = vld [vmem:[#allocation5 + $0x1c0] sm:$0xff]
    %v97 = vld [vmem:[#allocation5 + $0x1c8] sm:$0xff]
    %v98 = vld [vmem:[#allocation5 + $0x1d0] sm:$0xff]
    %v99 = vld [vmem:[#allocation5 + $0x1d8] sm:$0xff]
    %v100 = vld [vmem:[#allocation5 + $0x1e0] sm:$0xff]
    %v101 = vld [vmem:[#allocation5 + $0x1e8] sm:$0xff]
    %v102 = vld [vmem:[#allocation5 + $0x1f0] sm:$0xff]
    %v103 = vld [vmem:[#allocation5 + $0x1f8] sm:$0xff]
    %v105 = vlaneseq
    %v106 = vshrl.u32 %v105, 7
    %v107 = vsub.s32 0, %v106
    %v108 = vrot.slane %v39, %v107
    %v109 = vlaneseq
    %v110 = vshrl.u32 %v109, 7
    %v111 = vsub.s32 1, %v110
    %v112 = vrot.slane %v39, %v111
    %v113 = vlaneseq
    %v114 = vshrl.u32 %v113, 7
    %v115 = vsub.s32 2, %v114
    %v116 = vrot.slane %v39, %v115
    %v117 = vlaneseq
    %v118 = vshrl.u32 %v117, 7
    %v119 = vsub.s32 3, %v118
    %v120 = vrot.slane %v39, %v119
    %125 = vmatprep.subr.mxu0 %v41
    %126 = vmatpush1.msra.mxu0 %v40
    %127 = vmatprep.subr.mxu0 %v45
    %128 = vmatpush1.msra.mxu0 %v44
    %129 = vmatprep.subr.mxu0 %v49
    %130 = vmatpush1.msra.mxu0 %v48
    %131 = vmatprep.subr.mxu0 %v53
    %132 = vmatpush1.msra.mxu0 %v52
    %133 = vmatprep.subr.mxu0 %v57
    %134 = vmatpush1.msra.mxu0 %v56
    %135 = vmatprep.subr.mxu0 %v61
    %136 = vmatpush1.msra.mxu0 %v60
    %137 = vmatprep.subr.mxu0 %v65
    %138 = vmatpush1.msra.mxu0 %v64
    %139 = vmatprep.subr.mxu0 %v69
    %140 = vmatpush1.msra.mxu0 %v68
    %141 = vmatprep.subr.mxu0 %v73
    %142 = vmatpush1.msra.mxu0 %v72
    %143 = vmatprep.subr.mxu0 %v77
    %144 = vmatpush1.msra.mxu0 %v76
    %145 = vmatprep.subr.mxu0 %v81
    %146 = vmatpush1.msra.mxu0 %v80
    %147 = vmatprep.subr.mxu0 %v85
    %148 = vmatpush1.msra.mxu0 %v84
    %149 = vmatprep.subr.mxu0 %v89
    %150 = vmatpush1.msra.mxu0 %v88
    %151 = vmatprep.subr.mxu0 %v93
    %152 = vmatpush1.msra.mxu0 %v92
    %153 = vmatprep.subr.mxu0 %v97
    %154 = vmatpush1.msra.mxu0 %v96
    %155 = vmatprep.subr.mxu0 %v101
    %156 = vmatpush1.msra.mxu0 %v100
    %157 = vmatprep.subr.mxu0 0.0
    %158 = vmatpush1.msra.mxu0 0.0
    %159 = vmatprep.subr.mxu0 0.0
    %160 = vmatpush1.msra.mxu0 0.0
    %161 = vmatprep.subr.mxu0 0.0
    %162 = vmatpush1.msra.mxu0 0.0
    %163 = vmatprep.subr.mxu0 0.0
    %164 = vmatpush1.msra.mxu0 0.0
    %165 = vmatprep.subr.mxu0 0.0
    %166 = vmatpush1.msra.mxu0 0.0
    %167 = vmatprep.subr.mxu0 0.0
    %168 = vmatpush1.msra.mxu0 0.0
    %169 = vmatprep.subr.mxu0 0.0
    %170 = vmatpush1.msra.mxu0 0.0
    %171 = vmatprep.subr.mxu0 0.0
    %172 = vmatpush1.msra.mxu0 0.0
    %173 = vmatprep.subr.mxu0 0.0
    %174 = vmatpush1.msra.mxu0 0.0
    %175 = vmatprep.subr.mxu0 0.0
    %176 = vmatpush1.msra.mxu0 0.0
    %177 = vmatprep.subr.mxu0 0.0
    %178 = vmatpush1.msra.mxu0 0.0
    %179 = vmatprep.subr.mxu0 0.0
    %180 = vmatpush1.msra.mxu0 0.0
    %181 = vmatprep.subr.mxu0 0.0
    %182 = vmatpush1.msra.mxu0 0.0
    %183 = vmatprep.subr.mxu0 0.0
    %184 = vmatpush1.msra.mxu0 0.0
    %185 = vmatprep.subr.mxu0 0.0
    %186 = vmatpush1.msra.mxu0 0.0
    %187 = vmatprep.subr.mxu0 0.0
    %188 = vmatpush1.msra.mxu0 0.0
    %189 = vmatprep.mubr.f32.mxu0 0.0
    %190 = vmatmul.mubr.f32.gmra.mrb[0].mxu0 0.0
    %v191 = vpop.f32.mrb[0].mxu0
    %v192 = vadd.f32 %v108, %v191
    %v193 = vpop.f32.mrb[0].mxu0
    %v194 = vadd.f32 %v112, %v193
    %195 = vdwg.mxu0
    %196 = vmatprep.subr.mxu0 %v43
    %197 = vmatpush1.msra.mxu0 %v42
    %198 = vmatprep.subr.mxu0 %v47
    %199 = vmatpush1.msra.mxu0 %v46
    %200 = vmatprep.subr.mxu0 %v51
    %201 = vmatpush1.msra.mxu0 %v50
    %202 = vmatprep.subr.mxu0 %v55
    %203 = vmatpush1.msra.mxu0 %v54
    %204 = vmatprep.subr.mxu0 %v59
    %205 = vmatpush1.msra.mxu0 %v58
    %206 = vmatprep.subr.mxu0 %v63
    %207 = vmatpush1.msra.mxu0 %v62
    %208 = vmatprep.subr.mxu0 %v67
    %209 = vmatpush1.msra.mxu0 %v66
    %210 = vmatprep.subr.mxu0 %v71
    %211 = vmatpush1.msra.mxu0 %v70
    %212 = vmatprep.subr.mxu0 %v75
    %213 = vmatpush1.msra.mxu0 %v74
    %214 = vmatprep.subr.mxu0 %v79
    %215 = vmatpush1.msra.mxu0 %v78
    %216 = vmatprep.subr.mxu0 %v83
    %217 = vmatpush1.msra.mxu0 %v82
    %218 = vmatprep.subr.mxu0 %v87
    %219 = vmatpush1.msra.mxu0 %v86
    %220 = vmatprep.subr.mxu0 %v91
    %221 = vmatpush1.msra.mxu0 %v90
    %222 = vmatprep.subr.mxu0 %v95
    %223 = vmatpush1.msra.mxu0 %v94
    %224 = vmatprep.subr.mxu0 %v99
    %225 = vmatpush1.msra.mxu0 %v98
    %226 = vmatprep.subr.mxu0 %v103
    %227 = vmatpush1.msra.mxu0 %v102
    %228 = vmatprep.subr.mxu0 0.0
    %229 = vmatpush1.msra.mxu0 0.0
    %230 = vmatprep.subr.mxu0 0.0
    %231 = vmatpush1.msra.mxu0 0.0
    %232 = vmatprep.subr.mxu0 0.0
    %233 = vmatpush1.msra.mxu0 0.0
    %234 = vmatprep.subr.mxu0 0.0
    %235 = vmatpush1.msra.mxu0 0.0
    %236 = vmatprep.subr.mxu0 0.0
    %237 = vmatpush1.msra.mxu0 0.0
    %238 = vmatprep.subr.mxu0 0.0
    %239 = vmatpush1.msra.mxu0 0.0
    %240 = vmatprep.subr.mxu0 0.0
    %241 = vmatpush1.msra.mxu0 0.0
    %242 = vmatprep.subr.mxu0 0.0
    %243 = vmatpush1.msra.mxu0 0.0
    %244 = vmatprep.subr.mxu0 0.0
    %245 = vmatpush1.msra.mxu0 0.0
    %246 = vmatprep.subr.mxu0 0.0
    %247 = vmatpush1.msra.mxu0 0.0
    %248 = vmatprep.subr.mxu0 0.0
    %249 = vmatpush1.msra.mxu0 0.0
    %250 = vmatprep.subr.mxu0 0.0
    %251 = vmatpush1.msra.mxu0 0.0
    %252 = vmatprep.subr.mxu0 0.0
    %253 = vmatpush1.msra.mxu0 0.0
    %254 = vmatprep.subr.mxu0 0.0
    %255 = vmatpush1.msra.mxu0 0.0
    %256 = vmatprep.subr.mxu0 0.0
    %257 = vmatpush1.msra.mxu0 0.0
    %258 = vmatprep.subr.mxu0 0.0
    %259 = vmatpush1.msra.mxu0 0.0
    %260 = vmatprep.mubr.f32.mxu0 0.0
    %261 = vmatmul.mubr.f32.gmra.mrb[0].mxu0 0.0
    %v262 = vpop.f32.mrb[0].mxu0
    %v263 = vadd.f32 %v116, %v262
    %v264 = vpop.f32.mrb[0].mxu0
    %v265 = vadd.f32 %v120, %v264
    %266 = vdwg.mxu0
    %v267 = vxor.u32 %v192, 2147483648
    %v268 = vmul.f32 %v267, 1.442695
    %v269 = vpow.pop %v268
    %v270 = vadd.f32 %v269, 1.0
    %v271 = vrcp.pop %v270
    %v272 = vmul.f32 1.0, %v271
    %v273 = vxor.u32 %v194, 2147483648
    %v274 = vmul.f32 %v273, 1.442695
    %v275 = vpow.pop %v274
    %v276 = vadd.f32 %v275, 1.0
    %v277 = vrcp.pop %v276
    %v278 = vmul.f32 1.0, %v277
    %v279 = vtanh.pop %v263
    %v280 = vxor.u32 %v265, 2147483648
    %v281 = vmul.f32 %v280, 1.442695
    %v282 = vpow.pop %v281
    %v283 = vadd.f32 %v282, 1.0
    %v284 = vrcp.pop %v283
    %v285 = vmul.f32 1.0, %v284
    %v286 = vmul.f32 %v278, 0.0
    %v287 = vmul.f32 %v272, %v279
    %v288 = vadd.f32 %v286, %v287
    %v289 = vtanh.pop %v288
    %v290 = vmul.f32 %v285, %v289
    %291 = vst [vmem:[#allocation7] sm:$0x1] %v290
    %s292 = scalar_lea.vmem [#allocation2], 1
    %v293 = vld [vmem:[%s292] ss:$8 sm:$0xf]
    %v294 = vld [vmem:[#allocation5] sm:$0xff]
    %v295 = vld [vmem:[#allocation5 + $0x8] sm:$0xff]
    %v296 = vld [vmem:[#allocation5 + $0x10] sm:$0xff]
    %v297 = vld [vmem:[#allocation5 + $0x18] sm:$0xff]
    %v298 = vld [vmem:[#allocation5 + $0x20] sm:$0xff]
    %v299 = vld [vmem:[#allocation5 + $0x28] sm:$0xff]
    %v300 = vld [vmem:[#allocation5 + $0x30] sm:$0xff]
    %v301 = vld [vmem:[#allocation5 + $0x38] sm:$0xff]
    %v302 = vld [vmem:[#allocation5 + $0x40] sm:$0xff]
    %v303 = vld [vmem:[#allocation5 + $0x48] sm:$0xff]
    %v304 = vld [vmem:[#allocation5 + $0x50] sm:$0xff]
    %v305 = vld [vmem:[#allocation5 + $0x58] sm:$0xff]
    %v306 = vld [vmem:[#allocation5 + $0x60] sm:$0xff]
    %v307 = vld [vmem:[#allocation5 + $0x68] sm:$0xff]
    %v308 = vld [vmem:[#allocation5 + $0x70] sm:$0xff]
    %v309 = vld [vmem:[#allocation5 + $0x78] sm:$0xff]
    %v310 = vld [vmem:[#allocation5 + $0x80] sm:$0xff]
    %v311 = vld [vmem:[#allocation5 + $0x88] sm:$0xff]
    %v312 = vld [vmem:[#allocation5 + $0x90] sm:$0xff]
    %v313 = vld [vmem:[#allocation5 + $0x98] sm:$0xff]
    %v314 = vld [vmem:[#allocation5 + $0xa0] sm:$0xff]
    %v315 = vld [vmem:[#allocation5 + $0xa8] sm:$0xff]
    %v316 = vld [vmem:[#allocation5 + $0xb0] sm:$0xff]
    %v317 = vld [vmem:[#allocation5 + $0xb8] sm:$0xff]
    %v318 = vld [vmem:[#allocation5 + $0xc0] sm:$0xff]
    %v319 = vld [vmem:[#allocation5 + $0xc8] sm:$0xff]
    %v320 = vld [vmem:[#allocation5 + $0xd0] sm:$0xff]
    %v321 = vld [vmem:[#allocation5 + $0xd8] sm:$0xff]
    %v322 = vld [vmem:[#allocation5 + $0xe0] sm:$0xff]
    %v323 = vld [vmem:[#allocation5 + $0xe8] sm:$0xff]
    %v324 = vld [vmem:[#allocation5 + $0xf0] sm:$0xff]
    %v325 = vld [vmem:[#allocation5 + $0xf8] sm:$0xff]
    %v326 = vld [vmem:[#allocation5 + $0x100] sm:$0xff]
    %v327 = vld [vmem:[#allocation5 + $0x108] sm:$0xff]
    %v328 = vld [vmem:[#allocation5 + $0x110] sm:$0xff]
    %v329 = vld [vmem:[#allocation5 + $0x118] sm:$0xff]
    %v330 = vld [vmem:[#allocation5 + $0x120] sm:$0xff]
    %v331 = vld [vmem:[#allocation5 + $0x128] sm:$0xff]
    %v332 = vld [vmem:[#allocation5 + $0x130] sm:$0xff]
    %v333 = vld [vmem:[#allocation5 + $0x138] sm:$0xff]
    %v334 = vld [vmem:[#allocation5 + $0x140] sm:$0xff]
    %v335 = vld [vmem:[#allocation5 + $0x148] sm:$0xff]
    %v336 = vld [vmem:[#allocation5 + $0x150] sm:$0xff]
    %v337 = vld [vmem:[#allocation5 + $0x158] sm:$0xff]
    %v338 = vld [vmem:[#allocation5 + $0x160] sm:$0xff]
    %v339 = vld [vmem:[#allocation5 + $0x168] sm:$0xff]
    %v340 = vld [vmem:[#allocation5 + $0x170] sm:$0xff]
    %v341 = vld [vmem:[#allocation5 + $0x178] sm:$0xff]
    %v342 = vld [vmem:[#allocation5 + $0x180] sm:$0xff]
    %v343 = vld [vmem:[#allocation5 + $0x188] sm:$0xff]
    %v344 = vld [vmem:[#allocation5 + $0x190] sm:$0xff]
    %v345 = vld [vmem:[#allocation5 + $0x198] sm:$0xff]
    %v346 = vld [vmem:[#allocation5 + $0x1a0] sm:$0xff]
    %v347 = vld [vmem:[#allocation5 + $0x1a8] sm:$0xff]
    %v348 = vld [vmem:[#allocation5 + $0x1b0] sm:$0xff]
    %v349 = vld [vmem:[#allocation5 + $0x1b8] sm:$0xff]
    %v350 = vld [vmem:[#allocation5 + $0x1c0] sm:$0xff]
    %v351 = vld [vmem:[#allocation5 + $0x1c8] sm:$0xff]
    %v352 = vld [vmem:[#allocation5 + $0x1d0] sm:$0xff]
    %v353 = vld [vmem:[#allocation5 + $0x1d8] sm:$0xff]
    %v354 = vld [vmem:[#allocation5 + $0x1e0] sm:$0xff]
    %v355 = vld [vmem:[#allocation5 + $0x1e8] sm:$0xff]
    %v356 = vld [vmem:[#allocation5 + $0x1f0] sm:$0xff]
    %v357 = vld [vmem:[#allocation5 + $0x1f8] sm:$0xff]
    %v359 = vlaneseq
    %v360 = vshrl.u32 %v359, 7
    %v361 = vsub.s32 0, %v360
    %v362 = vrot.slane %v293, %v361
    %v363 = vlaneseq
    %v364 = vshrl.u32 %v363, 7
    %v365 = vsub.s32 1, %v364
    %v366 = vrot.slane %v293, %v365
    %v367 = vlaneseq
    %v368 = vshrl.u32 %v367, 7
    %v369 = vsub.s32 2, %v368
    %v370 = vrot.slane %v293, %v369
    %v371 = vlaneseq
    %v372 = vshrl.u32 %v371, 7
    %v373 = vsub.s32 3, %v372
    %v374 = vrot.slane %v293, %v373
    %379 = vmatprep.subr.mxu0 %v295
    %380 = vmatpush1.msra.mxu0 %v294
    %381 = vmatprep.subr.mxu0 %v299
    %382 = vmatpush1.msra.mxu0 %v298
    %383 = vmatprep.subr.mxu0 %v303
    %384 = vmatpush1.msra.mxu0 %v302
    %385 = vmatprep.subr.mxu0 %v307
    %386 = vmatpush1.msra.mxu0 %v306
    %387 = vmatprep.subr.mxu0 %v311
    %388 = vmatpush1.msra.mxu0 %v310
    %389 = vmatprep.subr.mxu0 %v315
    %390 = vmatpush1.msra.mxu0 %v314
    %391 = vmatprep.subr.mxu0 %v319
    %392 = vmatpush1.msra.mxu0 %v318
    %393 = vmatprep.subr.mxu0 %v323
    %394 = vmatpush1.msra.mxu0 %v322
    %395 = vmatprep.subr.mxu0 %v327
    %396 = vmatpush1.msra.mxu0 %v326
    %397 = vmatprep.subr.mxu0 %v331
    %398 = vmatpush1.msra.mxu0 %v330
    %399 = vmatprep.subr.mxu0 %v335
    %400 = vmatpush1.msra.mxu0 %v334
    %401 = vmatprep.subr.mxu0 %v339
    %402 = vmatpush1.msra.mxu0 %v338
    %403 = vmatprep.subr.mxu0 %v343
    %404 = vmatpush1.msra.mxu0 %v342
    %405 = vmatprep.subr.mxu0 %v347
    %406 = vmatpush1.msra.mxu0 %v346
    %407 = vmatprep.subr.mxu0 %v351
    %408 = vmatpush1.msra.mxu0 %v350
    %409 = vmatprep.subr.mxu0 %v355
    %410 = vmatpush1.msra.mxu0 %v354
    %411 = vmatprep.subr.mxu0 0.0
    %412 = vmatpush1.msra.mxu0 0.0
    %413 = vmatprep.subr.mxu0 0.0
    %414 = vmatpush1.msra.mxu0 0.0
    %415 = vmatprep.subr.mxu0 0.0
    %416 = vmatpush1.msra.mxu0 0.0
    %417 = vmatprep.subr.mxu0 0.0
    %418 = vmatpush1.msra.mxu0 0.0
    %419 = vmatprep.subr.mxu0 0.0
    %420 = vmatpush1.msra.mxu0 0.0
    %421 = vmatprep.subr.mxu0 0.0
    %422 = vmatpush1.msra.mxu0 0.0
    %423 = vmatprep.subr.mxu0 0.0
    %424 = vmatpush1.msra.mxu0 0.0
    %425 = vmatprep.subr.mxu0 0.0
    %426 = vmatpush1.msra.mxu0 0.0
    %427 = vmatprep.subr.mxu0 0.0
    %428 = vmatpush1.msra.mxu0 0.0
    %429 = vmatprep.subr.mxu0 0.0
    %430 = vmatpush1.msra.mxu0 0.0
    %431 = vmatprep.subr.mxu0 0.0
    %432 = vmatpush1.msra.mxu0 0.0
    %433 = vmatprep.subr.mxu0 0.0
    %434 = vmatpush1.msra.mxu0 0.0
    %435 = vmatprep.subr.mxu0 0.0
    %436 = vmatpush1.msra.mxu0 0.0
    %437 = vmatprep.subr.mxu0 0.0
    %438 = vmatpush1.msra.mxu0 0.0
    %439 = vmatprep.subr.mxu0 0.0
    %440 = vmatpush1.msra.mxu0 0.0
    %441 = vmatprep.subr.mxu0 0.0
    %442 = vmatpush1.msra.mxu0 0.0
    %443 = vmatprep.mubr.f32.mxu0 0.0
    %444 = vmatmul.mubr.f32.gmra.mrb[0].mxu0 %v290
    %v445 = vpop.f32.mrb[0].mxu0
    %v446 = vadd.f32 %v362, %v445
    %v447 = vpop.f32.mrb[0].mxu0
    %v448 = vadd.f32 %v366, %v447
    %449 = vdwg.mxu0
    %450 = vmatprep.subr.mxu0 %v297
    %451 = vmatpush1.msra.mxu0 %v296
    %452 = vmatprep.subr.mxu0 %v301
    %453 = vmatpush1.msra.mxu0 %v300
    %454 = vmatprep.subr.mxu0 %v305
    %455 = vmatpush1.msra.mxu0 %v304
    %456 = vmatprep.subr.mxu0 %v309
    %457 = vmatpush1.msra.mxu0 %v308
    %458 = vmatprep.subr.mxu0 %v313
    %459 = vmatpush1.msra.mxu0 %v312
    %460 = vmatprep.subr.mxu0 %v317
    %461 = vmatpush1.msra.mxu0 %v316
    %462 = vmatprep.subr.mxu0 %v321
    %463 = vmatpush1.msra.mxu0 %v320
    %464 = vmatprep.subr.mxu0 %v325
    %465 = vmatpush1.msra.mxu0 %v324
    %466 = vmatprep.subr.mxu0 %v329
    %467 = vmatpush1.msra.mxu0 %v328
    %468 = vmatprep.subr.mxu0 %v333
    %469 = vmatpush1.msra.mxu0 %v332
    %470 = vmatprep.subr.mxu0 %v337
    %471 = vmatpush1.msra.mxu0 %v336
    %472 = vmatprep.subr.mxu0 %v341
    %473 = vmatpush1.msra.mxu0 %v340
    %474 = vmatprep.subr.mxu0 %v345
    %475 = vmatpush1.msra.mxu0 %v344
    %476 = vmatprep.subr.mxu0 %v349
    %477 = vmatpush1.msra.mxu0 %v348
    %478 = vmatprep.subr.mxu0 %v353
    %479 = vmatpush1.msra.mxu0 %v352
    %480 = vmatprep.subr.mxu0 %v357
    %481 = vmatpush1.msra.mxu0 %v356
    %482 = vmatprep.subr.mxu0 0.0
    %483 = vmatpush1.msra.mxu0 0.0
    %484 = vmatprep.subr.mxu0 0.0
    %485 = vmatpush1.msra.mxu0 0.0
    %486 = vmatprep.subr.mxu0 0.0
    %487 = vmatpush1.msra.mxu0 0.0
    %488 = vmatprep.subr.mxu0 0.0
    %489 = vmatpush1.msra.mxu0 0.0
    %490 = vmatprep.subr.mxu0 0.0
    %491 = vmatpush1.msra.mxu0 0.0
    %492 = vmatprep.subr.mxu0 0.0
    %493 = vmatpush1.msra.mxu0 0.0
    %494 = vmatprep.subr.mxu0 0.0
    %495 = vmatpush1.msra.mxu0 0.0
    %496 = vmatprep.subr.mxu0 0.0
    %497 = vmatpush1.msra.mxu0 0.0
    %498 = vmatprep.subr.mxu0 0.0
    %499 = vmatpush1.msra.mxu0 0.0
    %500 = vmatprep.subr.mxu0 0.0
    %501 = vmatpush1.msra.mxu0 0.0
    %502 = vmatprep.subr.mxu0 0.0
    %503 = vmatpush1.msra.mxu0 0.0
    %504 = vmatprep.subr.mxu0 0.0
    %505 = vmatpush1.msra.mxu0 0.0
    %506 = vmatprep.subr.mxu0 0.0
    %507 = vmatpush1.msra.mxu0 0.0
    %508 = vmatprep.subr.mxu0 0.0
    %509 = vmatpush1.msra.mxu0 0.0
    %510 = vmatprep.subr.mxu0 0.0
    %511 = vmatpush1.msra.mxu0 0.0
    %512 = vmatprep.subr.mxu0 0.0
    %513 = vmatpush1.msra.mxu0 0.0
    %514 = vmatprep.mubr.f32.mxu0 0.0
    %515 = vmatmul.mubr.f32.gmra.mrb[0].mxu0 %v290
    %v516 = vpop.f32.mrb[0].mxu0
    %v517 = vadd.f32 %v370, %v516
    %v518 = vpop.f32.mrb[0].mxu0
    %v519 = vadd.f32 %v374, %v518
    %520 = vdwg.mxu0
    %v521 = vxor.u32 %v446, 2147483648
    %v522 = vmul.f32 %v521, 1.442695
    %v523 = vpow.pop %v522
    %v524 = vadd.f32 %v523, 1.0
    %v525 = vrcp.pop %v524
    %v526 = vmul.f32 1.0, %v525
    %v527 = vxor.u32 %v448, 2147483648
    %v528 = vmul.f32 %v527, 1.442695
    %v529 = vpow.pop %v528
    %v530 = vadd.f32 %v529, 1.0
    %v531 = vrcp.pop %v530
    %v532 = vmul.f32 1.0, %v531
    %v533 = vtanh.pop %v517
    %v534 = vxor.u32 %v519, 2147483648
    %v535 = vmul.f32 %v534, 1.442695
    %v536 = vpow.pop %v535
    %v537 = vadd.f32 %v536, 1.0
    %v538 = vrcp.pop %v537
    %v539 = vmul.f32 1.0, %v538
    %v540 = vmul.f32 %v532, %v288
    %v541 = vmul.f32 %v526, %v533
    %v542 = vadd.f32 %v540, %v541
    %v543 = vtanh.pop %v542
    %v544 = vmul.f32 %v539, %v543
    %545 = vst [vmem:[#allocation7 + $0x1] sm:$0x1] %v544
    %s546 = scalar_lea.vmem [#allocation2], 2
    %v547 = vld [vmem:[%s546] ss:$8 sm:$0xf]
    %v548 = vld [vmem:[#allocation5] sm:$0xff]
    %v549 = vld [vmem:[#allocation5 + $0x8] sm:$0xff]
    %v550 = vld [vmem:[#allocation5 + $0x10] sm:$0xff]
    %v551 = vld [vmem:[#allocation5 + $0x18] sm:$0xff]
    %v552 = vld [vmem:[#allocation5 + $0x20] sm:$0xff]
    %v553 = vld [vmem:[#allocation5 + $0x28] sm:$0xff]
    %v554 = vld [vmem:[#allocation5 + $0x30] sm:$0xff]
    %v555 = vld [vmem:[#allocation5 + $0x38] sm:$0xff]
    %v556 = vld [vmem:[#allocation5 + $0x40] sm:$0xff]
    %v557 = vld [vmem:[#allocation5 + $0x48] sm:$0xff]
    %v558 = vld [vmem:[#allocation5 + $0x50] sm:$0xff]
    %v559 = vld [vmem:[#allocation5 + $0x58] sm:$0xff]
    %v560 = vld [vmem:[#allocation5 + $0x60] sm:$0xff]
    %v561 = vld [vmem:[#allocation5 + $0x68] sm:$0xff]
    %v562 = vld [vmem:[#allocation5 + $0x70] sm:$0xff]
    %v563 = vld [vmem:[#allocation5 + $0x78] sm:$0xff]
    %v564 = vld [vmem:[#allocation5 + $0x80] sm:$0xff]
    %v565 = vld [vmem:[#allocation5 + $0x88] sm:$0xff]
    %v566 = vld [vmem:[#allocation5 + $0x90] sm:$0xff]
    %v567 = vld [vmem:[#allocation5 + $0x98] sm:$0xff]
    %v568 = vld [vmem:[#allocation5 + $0xa0] sm:$0xff]
    %v569 = vld [vmem:[#allocation5 + $0xa8] sm:$0xff]
    %v570 = vld [vmem:[#allocation5 + $0xb0] sm:$0xff]
    %v571 = vld [vmem:[#allocation5 + $0xb8] sm:$0xff]
    %v572 = vld [vmem:[#allocation5 + $0xc0] sm:$0xff]
    %v573 = vld [vmem:[#allocation5 + $0xc8] sm:$0xff]
    %v574 = vld [vmem:[#allocation5 + $0xd0] sm:$0xff]
    %v575 = vld [vmem:[#allocation5 + $0xd8] sm:$0xff]
    %v576 = vld [vmem:[#allocation5 + $0xe0] sm:$0xff]
    %v577 = vld [vmem:[#allocation5 + $0xe8] sm:$0xff]
    %v578 = vld [vmem:[#allocation5 + $0xf0] sm:$0xff]
    %v579 = vld [vmem:[#allocation5 + $0xf8] sm:$0xff]
    %v580 = vld [vmem:[#allocation5 + $0x100] sm:$0xff]
    %v581 = vld [vmem:[#allocation5 + $0x108] sm:$0xff]
    %v582 = vld [vmem:[#allocation5 + $0x110] sm:$0xff]
    %v583 = vld [vmem:[#allocation5 + $0x118] sm:$0xff]
    %v584 = vld [vmem:[#allocation5 + $0x120] sm:$0xff]
    %v585 = vld [vmem:[#allocation5 + $0x128] sm:$0xff]
    %v586 = vld [vmem:[#allocation5 + $0x130] sm:$0xff]
    %v587 = vld [vmem:[#allocation5 + $0x138] sm:$0xff]
    %v588 = vld [vmem:[#allocation5 + $0x140] sm:$0xff]
    %v589 = vld [vmem:[#allocation5 + $0x148] sm:$0xff]
    %v590 = vld [vmem:[#allocation5 + $0x150] sm:$0xff]
    %v591 = vld [vmem:[#allocation5 + $0x158] sm:$0xff]
    %v592 = vld [vmem:[#allocation5 + $0x160] sm:$0xff]
    %v593 = vld [vmem:[#allocation5 + $0x168] sm:$0xff]
    %v594 = vld [vmem:[#allocation5 + $0x170] sm:$0xff]
    %v595 = vld [vmem:[#allocation5 + $0x178] sm:$0xff]
    %v596 = vld [vmem:[#allocation5 + $0x180] sm:$0xff]
    %v597 = vld [vmem:[#allocation5 + $0x188] sm:$0xff]
    %v598 = vld [vmem:[#allocation5 + $0x190] sm:$0xff]
    %v599 = vld [vmem:[#allocation5 + $0x198] sm:$0xff]
    %v600 = vld [vmem:[#allocation5 + $0x1a0] sm:$0xff]
    %v601 = vld [vmem:[#allocation5 + $0x1a8] sm:$0xff]
    %v602 = vld [vmem:[#allocation5 + $0x1b0] sm:$0xff]
    %v603 = vld [vmem:[#allocation5 + $0x1b8] sm:$0xff]
    %v604 = vld [vmem:[#allocation5 + $0x1c0] sm:$0xff]
    %v605 = vld [vmem:[#allocation5 + $0x1c8] sm:$0xff]
    %v606 = vld [vmem:[#allocation5 + $0x1d0] sm:$0xff]
    %v607 = vld [vmem:[#allocation5 + $0x1d8] sm:$0xff]
    %v608 = vld [vmem:[#allocation5 + $0x1e0] sm:$0xff]
    %v609 = vld [vmem:[#allocation5 + $0x1e8] sm:$0xff]
    %v610 = vld [vmem:[#allocation5 + $0x1f0] sm:$0xff]
    %v611 = vld [vmem:[#allocation5 + $0x1f8] sm:$0xff]
    %v613 = vlaneseq
    %v614 = vshrl.u32 %v613, 7
    %v615 = vsub.s32 0, %v614
    %v616 = vrot.slane %v547, %v615
    %v617 = vlaneseq
    %v618 = vshrl.u32 %v617, 7
    %v619 = vsub.s32 1, %v618
    %v620 = vrot.slane %v547, %v619
    %v621 = vlaneseq
    %v622 = vshrl.u32 %v621, 7
    %v623 = vsub.s32 2, %v622
    %v624 = vrot.slane %v547, %v623
    %v625 = vlaneseq
    %v626 = vshrl.u32 %v625, 7
    %v627 = vsub.s32 3, %v626
    %v628 = vrot.slane %v547, %v627
    %633 = vmatprep.subr.mxu0 %v549
    %634 = vmatpush1.msra.mxu0 %v548
    %635 = vmatprep.subr.mxu0 %v553
    %636 = vmatpush1.msra.mxu0 %v552
    %637 = vmatprep.subr.mxu0 %v557
    %638 = vmatpush1.msra.mxu0 %v556
    %639 = vmatprep.subr.mxu0 %v561
    %640 = vmatpush1.msra.mxu0 %v560
    %641 = vmatprep.subr.mxu0 %v565
    %642 = vmatpush1.msra.mxu0 %v564
    %643 = vmatprep.subr.mxu0 %v569
    %644 = vmatpush1.msra.mxu0 %v568
    %645 = vmatprep.subr.mxu0 %v573
    %646 = vmatpush1.msra.mxu0 %v572
    %647 = vmatprep.subr.mxu0 %v577
    %648 = vmatpush1.msra.mxu0 %v576
    %649 = vmatprep.subr.mxu0 %v581
    %650 = vmatpush1.msra.mxu0 %v580
    %651 = vmatprep.subr.mxu0 %v585
    %652 = vmatpush1.msra.mxu0 %v584
    %653 = vmatprep.subr.mxu0 %v589
    %654 = vmatpush1.msra.mxu0 %v588
    %655 = vmatprep.subr.mxu0 %v593
    %656 = vmatpush1.msra.mxu0 %v592
    %657 = vmatprep.subr.mxu0 %v597
    %658 = vmatpush1.msra.mxu0 %v596
    %659 = vmatprep.subr.mxu0 %v601
    %660 = vmatpush1.msra.mxu0 %v600
    %661 = vmatprep.subr.mxu0 %v605
    %662 = vmatpush1.msra.mxu0 %v604
    %663 = vmatprep.subr.mxu0 %v609
    %664 = vmatpush1.msra.mxu0 %v608
    %665 = vmatprep.subr.mxu0 0.0
    %666 = vmatpush1.msra.mxu0 0.0
    %667 = vmatprep.subr.mxu0 0.0
    %668 = vmatpush1.msra.mxu0 0.0
    %669 = vmatprep.subr.mxu0 0.0
    %670 = vmatpush1.msra.mxu0 0.0
    %671 = vmatprep.subr.mxu0 0.0
    %672 = vmatpush1.msra.mxu0 0.0
    %673 = vmatprep.subr.mxu0 0.0
    %674 = vmatpush1.msra.mxu0 0.0
    %675 = vmatprep.subr.mxu0 0.0
    %676 = vmatpush1.msra.mxu0 0.0
    %677 = vmatprep.subr.mxu0 0.0
    %678 = vmatpush1.msra.mxu0 0.0
    %679 = vmatprep.subr.mxu0 0.0
    %680 = vmatpush1.msra.mxu0 0.0
    %681 = vmatprep.subr.mxu0 0.0
    %682 = vmatpush1.msra.mxu0 0.0
    %683 = vmatprep.subr.mxu0 0.0
    %684 = vmatpush1.msra.mxu0 0.0
    %685 = vmatprep.subr.mxu0 0.0
    %686 = vmatpush1.msra.mxu0 0.0
    %687 = vmatprep.subr.mxu0 0.0
    %688 = vmatpush1.msra.mxu0 0.0
    %689 = vmatprep.subr.mxu0 0.0
    %690 = vmatpush1.msra.mxu0 0.0
    %691 = vmatprep.subr.mxu0 0.0
    %692 = vmatpush1.msra.mxu0 0.0
    %693 = vmatprep.subr.mxu0 0.0
    %694 = vmatpush1.msra.mxu0 0.0
    %695 = vmatprep.subr.mxu0 0.0
    %696 = vmatpush1.msra.mxu0 0.0
    %697 = vmatprep.mubr.f32.mxu0 0.0
    %698 = vmatmul.mubr.f32.gmra.mrb[0].mxu0 %v544
    %v699 = vpop.f32.mrb[0].mxu0
    %v700 = vadd.f32 %v616, %v699
    %v701 = vpop.f32.mrb[0].mxu0
    %v702 = vadd.f32 %v620, %v701
    %703 = vdwg.mxu0
    %704 = vmatprep.subr.mxu0 %v551
    %705 = vmatpush1.msra.mxu0 %v550
    %706 = vmatprep.subr.mxu0 %v555
    %707 = vmatpush1.msra.mxu0 %v554
    %708 = vmatprep.subr.mxu0 %v559
    %709 = vmatpush1.msra.mxu0 %v558
    %710 = vmatprep.subr.mxu0 %v563
    %711 = vmatpush1.msra.mxu0 %v562
    %712 = vmatprep.subr.mxu0 %v567
    %713 = vmatpush1.msra.mxu0 %v566
    %714 = vmatprep.subr.mxu0 %v571
    %715 = vmatpush1.msra.mxu0 %v570
    %716 = vmatprep.subr.mxu0 %v575
    %717 = vmatpush1.msra.mxu0 %v574
    %718 = vmatprep.subr.mxu0 %v579
    %719 = vmatpush1.msra.mxu0 %v578
    %720 = vmatprep.subr.mxu0 %v583
    %721 = vmatpush1.msra.mxu0 %v582
    %722 = vmatprep.subr.mxu0 %v587
    %723 = vmatpush1.msra.mxu0 %v586
    %724 = vmatprep.subr.mxu0 %v591
    %725 = vmatpush1.msra.mxu0 %v590
    %726 = vmatprep.subr.mxu0 %v595
    %727 = vmatpush1.msra.mxu0 %v594
    %728 = vmatprep.subr.mxu0 %v599
    %729 = vmatpush1.msra.mxu0 %v598
    %730 = vmatprep.subr.mxu0 %v603
    %731 = vmatpush1.msra.mxu0 %v602
    %732 = vmatprep.subr.mxu0 %v607
    %733 = vmatpush1.msra.mxu0 %v606
    %734 = vmatprep.subr.mxu0 %v611
    %735 = vmatpush1.msra.mxu0 %v610
    %736 = vmatprep.subr.mxu0 0.0
    %737 = vmatpush1.msra.mxu0 0.0
    %738 = vmatprep.subr.mxu0 0.0
    %739 = vmatpush1.msra.mxu0 0.0
    %740 = vmatprep.subr.mxu0 0.0
    %741 = vmatpush1.msra.mxu0 0.0
    %742 = vmatprep.subr.mxu0 0.0
    %743 = vmatpush1.msra.mxu0 0.0
    %744 = vmatprep.subr.mxu0 0.0
    %745 = vmatpush1.msra.mxu0 0.0
    %746 = vmatprep.subr.mxu0 0.0
    %747 = vmatpush1.msra.mxu0 0.0
    %748 = vmatprep.subr.mxu0 0.0
    %749 = vmatpush1.msra.mxu0 0.0
    %750 = vmatprep.subr.mxu0 0.0
    %751 = vmatpush1.msra.mxu0 0.0
    %752 = vmatprep.subr.mxu0 0.0
    %753 = vmatpush1.msra.mxu0 0.0
    %754 = vmatprep.subr.mxu0 0.0
    %755 = vmatpush1.msra.mxu0 0.0
    %756 = vmatprep.subr.mxu0 0.0
    %757 = vmatpush1.msra.mxu0 0.0
    %758 = vmatprep.subr.mxu0 0.0
    %759 = vmatpush1.msra.mxu0 0.0
    %760 = vmatprep.subr.mxu0 0.0
    %761 = vmatpush1.msra.mxu0 0.0
    %762 = vmatprep.subr.mxu0 0.0
    %763 = vmatpush1.msra.mxu0 0.0
    %764 = vmatprep.subr.mxu0 0.0
    %765 = vmatpush1.msra.mxu0 0.0
    %766 = vmatprep.subr.mxu0 0.0
    %767 = vmatpush1.msra.mxu0 0.0
    %768 = vmatprep.mubr.f32.mxu0 0.0
    %769 = vmatmul.mubr.f32.gmra.mrb[0].mxu0 %v544
    %v770 = vpop.f32.mrb[0].mxu0
    %v771 = vadd.f32 %v624, %v770
    %v772 = vpop.f32.mrb[0].mxu0
    %v773 = vadd.f32 %v628, %v772
    %774 = vdwg.mxu0
    %v775 = vxor.u32 %v700, 2147483648
    %v776 = vmul.f32 %v775, 1.442695
    %v777 = vpow.pop %v776
    %v778 = vadd.f32 %v777, 1.0
    %v779 = vrcp.pop %v778
    %v780 = vmul.f32 1.0, %v779
    %v781 = vxor.u32 %v702, 2147483648
    %v782 = vmul.f32 %v781, 1.442695
    %v783 = vpow.pop %v782
    %v784 = vadd.f32 %v783, 1.0
    %v785 = vrcp.pop %v784
    %v786 = vmul.f32 1.0, %v785
    %v787 = vtanh.pop %v771
    %v788 = vxor.u32 %v773, 2147483648
    %v789 = vmul.f32 %v788, 1.442695
    %v790 = vpow.pop %v789
    %v791 = vadd.f32 %v790, 1.0
    %v792 = vrcp.pop %v791
    %v793 = vmul.f32 1.0, %v792
    %v794 = vmul.f32 %v786, %v542
    %v795 = vmul.f32 %v780, %v787
    %v796 = vadd.f32 %v794, %v795
    %v797 = vtanh.pop %v796
    %v798 = vmul.f32 %v793, %v797
    %799 = vst [vmem:[#allocation7 + $0x2] sm:$0x1] %v798
    %s800 = scalar_lea.vmem [#allocation2], 3
    %v801 = vld [vmem:[%s800] ss:$8 sm:$0xf]
    %v802 = vld [vmem:[#allocation5] sm:$0xff]
    %v803 = vld [vmem:[#allocation5 + $0x8] sm:$0xff]
    %v804 = vld [vmem:[#allocation5 + $0x10] sm:$0xff]
    %v805 = vld [vmem:[#allocation5 + $0x18] sm:$0xff]
    %v806 = vld [vmem:[#allocation5 + $0x20] sm:$0xff]
    %v807 = vld [vmem:[#allocation5 + $0x28] sm:$0xff]
    %v808 = vld [vmem:[#allocation5 + $0x30] sm:$0xff]
    %v809 = vld [vmem:[#allocation5 + $0x38] sm:$0xff]
    %v810 = vld [vmem:[#allocation5 + $0x40] sm:$0xff]
    %v811 = vld [vmem:[#allocation5 + $0x48] sm:$0xff]
    %v812 = vld [vmem:[#allocation5 + $0x50] sm:$0xff]
    %v813 = vld [vmem:[#allocation5 + $0x58] sm:$0xff]
    %v814 = vld [vmem:[#allocation5 + $0x60] sm:$0xff]
    %v815 = vld [vmem:[#allocation5 + $0x68] sm:$0xff]
    %v816 = vld [vmem:[#allocation5 + $0x70] sm:$0xff]
    %v817 = vld [vmem:[#allocation5 + $0x78] sm:$0xff]
    %v818 = vld [vmem:[#allocation5 + $0x80] sm:$0xff]
    %v819 = vld [vmem:[#allocation5 + $0x88] sm:$0xff]
    %v820 = vld [vmem:[#allocation5 + $0x90] sm:$0xff]
    %v821 = vld [vmem:[#allocation5 + $0x98] sm:$0xff]
    %v822 = vld [vmem:[#allocation5 + $0xa0] sm:$0xff]
    %v823 = vld [vmem:[#allocation5 + $0xa8] sm:$0xff]
    %v824 = vld [vmem:[#allocation5 + $0xb0] sm:$0xff]
    %v825 = vld [vmem:[#allocation5 + $0xb8] sm:$0xff]
    %v826 = vld [vmem:[#allocation5 + $0xc0] sm:$0xff]
    %v827 = vld [vmem:[#allocation5 + $0xc8] sm:$0xff]
    %v828 = vld [vmem:[#allocation5 + $0xd0] sm:$0xff]
    %v829 = vld [vmem:[#allocation5 + $0xd8] sm:$0xff]
    %v830 = vld [vmem:[#allocation5 + $0xe0] sm:$0xff]
    %v831 = vld [vmem:[#allocation5 + $0xe8] sm:$0xff]
    %v832 = vld [vmem:[#allocation5 + $0xf0] sm:$0xff]
    %v833 = vld [vmem:[#allocation5 + $0xf8] sm:$0xff]
    %v834 = vld [vmem:[#allocation5 + $0x100] sm:$0xff]
    %v835 = vld [vmem:[#allocation5 + $0x108] sm:$0xff]
    %v836 = vld [vmem:[#allocation5 + $0x110] sm:$0xff]
    %v837 = vld [vmem:[#allocation5 + $0x118] sm:$0xff]
    %v838 = vld [vmem:[#allocation5 + $0x120] sm:$0xff]
    %v839 = vld [vmem:[#allocation5 + $0x128] sm:$0xff]
    %v840 = vld [vmem:[#allocation5 + $0x130] sm:$0xff]
    %v841 = vld [vmem:[#allocation5 + $0x138] sm:$0xff]
    %v842 = vld [vmem:[#allocation5 + $0x140] sm:$0xff]
    %v843 = vld [vmem:[#allocation5 + $0x148] sm:$0xff]
    %v844 = vld [vmem:[#allocation5 + $0x150] sm:$0xff]
    %v845 = vld [vmem:[#allocation5 + $0x158] sm:$0xff]
    %v846 = vld [vmem:[#allocation5 + $0x160] sm:$0xff]
    %v847 = vld [vmem:[#allocation5 + $0x168] sm:$0xff]
    %v848 = vld [vmem:[#allocation5 + $0x170] sm:$0xff]
    %v849 = vld [vmem:[#allocation5 + $0x178] sm:$0xff]
    %v850 = vld [vmem:[#allocation5 + $0x180] sm:$0xff]
    %v851 = vld [vmem:[#allocation5 + $0x188] sm:$0xff]
    %v852 = vld [vmem:[#allocation5 + $0x190] sm:$0xff]
    %v853 = vld [vmem:[#allocation5 + $0x198] sm:$0xff]
    %v854 = vld [vmem:[#allocation5 + $0x1a0] sm:$0xff]
    %v855 = vld [vmem:[#allocation5 + $0x1a8] sm:$0xff]
    %v856 = vld [vmem:[#allocation5 + $0x1b0] sm:$0xff]
    %v857 = vld [vmem:[#allocation5 + $0x1b8] sm:$0xff]
    %v858 = vld [vmem:[#allocation5 + $0x1c0] sm:$0xff]
    %v859 = vld [vmem:[#allocation5 + $0x1c8] sm:$0xff]
    %v860 = vld [vmem:[#allocation5 + $0x1d0] sm:$0xff]
    %v861 = vld [vmem:[#allocation5 + $0x1d8] sm:$0xff]
    %v862 = vld [vmem:[#allocation5 + $0x1e0] sm:$0xff]
    %v863 = vld [vmem:[#allocation5 + $0x1e8] sm:$0xff]
    %v864 = vld [vmem:[#allocation5 + $0x1f0] sm:$0xff]
    %v865 = vld [vmem:[#allocation5 + $0x1f8] sm:$0xff]
    %v867 = vlaneseq
    %v868 = vshrl.u32 %v867, 7
    %v869 = vsub.s32 0, %v868
    %v870 = vrot.slane %v801, %v869
    %v871 = vlaneseq
    %v872 = vshrl.u32 %v871, 7
    %v873 = vsub.s32 1, %v872
    %v874 = vrot.slane %v801, %v873
    %v875 = vlaneseq
    %v876 = vshrl.u32 %v875, 7
    %v877 = vsub.s32 2, %v876
    %v878 = vrot.slane %v801, %v877
    %v879 = vlaneseq
    %v880 = vshrl.u32 %v879, 7
    %v881 = vsub.s32 3, %v880
    %v882 = vrot.slane %v801, %v881
    %887 = vmatprep.subr.mxu0 %v803
    %888 = vmatpush1.msra.mxu0 %v802
    %889 = vmatprep.subr.mxu0 %v807
    %890 = vmatpush1.msra.mxu0 %v806
    %891 = vmatprep.subr.mxu0 %v811
    %892 = vmatpush1.msra.mxu0 %v810
    %893 = vmatprep.subr.mxu0 %v815
    %894 = vmatpush1.msra.mxu0 %v814
    %895 = vmatprep.subr.mxu0 %v819
    %896 = vmatpush1.msra.mxu0 %v818
    %897 = vmatprep.subr.mxu0 %v823
    %898 = vmatpush1.msra.mxu0 %v822
    %899 = vmatprep.subr.mxu0 %v827
    %900 = vmatpush1.msra.mxu0 %v826
    %901 = vmatprep.subr.mxu0 %v831
    %902 = vmatpush1.msra.mxu0 %v830
    %903 = vmatprep.subr.mxu0 %v835
    %904 = vmatpush1.msra.mxu0 %v834
    %905 = vmatprep.subr.mxu0 %v839
    %906 = vmatpush1.msra.mxu0 %v838
    %907 = vmatprep.subr.mxu0 %v843
    %908 = vmatpush1.msra.mxu0 %v842
    %909 = vmatprep.subr.mxu0 %v847
    %910 = vmatpush1.msra.mxu0 %v846
    %911 = vmatprep.subr.mxu0 %v851
    %912 = vmatpush1.msra.mxu0 %v850
    %913 = vmatprep.subr.mxu0 %v855
    %914 = vmatpush1.msra.mxu0 %v854
    %915 = vmatprep.subr.mxu0 %v859
    %916 = vmatpush1.msra.mxu0 %v858
    %917 = vmatprep.subr.mxu0 %v863
    %918 = vmatpush1.msra.mxu0 %v862
    %919 = vmatprep.subr.mxu0 0.0
    %920 = vmatpush1.msra.mxu0 0.0
    %921 = vmatprep.subr.mxu0 0.0
    %922 = vmatpush1.msra.mxu0 0.0
    %923 = vmatprep.subr.mxu0 0.0
    %924 = vmatpush1.msra.mxu0 0.0
    %925 = vmatprep.subr.mxu0 0.0
    %926 = vmatpush1.msra.mxu0 0.0
    %927 = vmatprep.subr.mxu0 0.0
    %928 = vmatpush1.msra.mxu0 0.0
    %929 = vmatprep.subr.mxu0 0.0
    %930 = vmatpush1.msra.mxu0 0.0
    %931 = vmatprep.subr.mxu0 0.0
    %932 = vmatpush1.msra.mxu0 0.0
    %933 = vmatprep.subr.mxu0 0.0
    %934 = vmatpush1.msra.mxu0 0.0
    %935 = vmatprep.subr.mxu0 0.0
    %936 = vmatpush1.msra.mxu0 0.0
    %937 = vmatprep.subr.mxu0 0.0
    %938 = vmatpush1.msra.mxu0 0.0
    %939 = vmatprep.subr.mxu0 0.0
    %940 = vmatpush1.msra.mxu0 0.0
    %941 = vmatprep.subr.mxu0 0.0
    %942 = vmatpush1.msra.mxu0 0.0
    %943 = vmatprep.subr.mxu0 0.0
    %944 = vmatpush1.msra.mxu0 0.0
    %945 = vmatprep.subr.mxu0 0.0
    %946 = vmatpush1.msra.mxu0 0.0
    %947 = vmatprep.subr.mxu0 0.0
    %948 = vmatpush1.msra.mxu0 0.0
    %949 = vmatprep.subr.mxu0 0.0
    %950 = vmatpush1.msra.mxu0 0.0
    %951 = vmatprep.mubr.f32.mxu0 0.0
    %952 = vmatmul.mubr.f32.gmra.mrb[0].mxu0 %v798
    %v953 = vpop.f32.mrb[0].mxu0
    %v954 = vadd.f32 %v870, %v953
    %v955 = vpop.f32.mrb[0].mxu0
    %v956 = vadd.f32 %v874, %v955
    %957 = vdwg.mxu0
    %958 = vmatprep.subr.mxu0 %v805
    %959 = vmatpush1.msra.mxu0 %v804
    %960 = vmatprep.subr.mxu0 %v809
    %961 = vmatpush1.msra.mxu0 %v808
    %962 = vmatprep.subr.mxu0 %v813
    %963 = vmatpush1.msra.mxu0 %v812
    %964 = vmatprep.subr.mxu0 %v817
    %965 = vmatpush1.msra.mxu0 %v816
    %966 = vmatprep.subr.mxu0 %v821
    %967 = vmatpush1.msra.mxu0 %v820
    %968 = vmatprep.subr.mxu0 %v825
    %969 = vmatpush1.msra.mxu0 %v824
    %970 = vmatprep.subr.mxu0 %v829
    %971 = vmatpush1.msra.mxu0 %v828
    %972 = vmatprep.subr.mxu0 %v833
    %973 = vmatpush1.msra.mxu0 %v832
    %974 = vmatprep.subr.mxu0 %v837
    %975 = vmatpush1.msra.mxu0 %v836
    %976 = vmatprep.subr.mxu0 %v841
    %977 = vmatpush1.msra.mxu0 %v840
    %978 = vmatprep.subr.mxu0 %v845
    %979 = vmatpush1.msra.mxu0 %v844
    %980 = vmatprep.subr.mxu0 %v849
    %981 = vmatpush1.msra.mxu0 %v848
    %982 = vmatprep.subr.mxu0 %v853
    %983 = vmatpush1.msra.mxu0 %v852
    %984 = vmatprep.subr.mxu0 %v857
    %985 = vmatpush1.msra.mxu0 %v856
    %986 = vmatprep.subr.mxu0 %v861
    %987 = vmatpush1.msra.mxu0 %v860
    %988 = vmatprep.subr.mxu0 %v865
    %989 = vmatpush1.msra.mxu0 %v864
    %990 = vmatprep.subr.mxu0 0.0
    %991 = vmatpush1.msra.mxu0 0.0
    %992 = vmatprep.subr.mxu0 0.0
    %993 = vmatpush1.msra.mxu0 0.0
    %994 = vmatprep.subr.mxu0 0.0
    %995 = vmatpush1.msra.mxu0 0.0
    %996 = vmatprep.subr.mxu0 0.0
    %997 = vmatpush1.msra.mxu0 0.0
    %998 = vmatprep.subr.mxu0 0.0
    %999 = vmatpush1.msra.mxu0 0.0
    %1000 = vmatprep.subr.mxu0 0.0
    %1001 = vmatpush1.msra.mxu0 0.0
    %1002 = vmatprep.subr.mxu0 0.0
    %1003 = vmatpush1.msra.mxu0 0.0
    %1004 = vmatprep.subr.mxu0 0.0
    %1005 = vmatpush1.msra.mxu0 0.0
    %1006 = vmatprep.subr.mxu0 0.0
    %1007 = vmatpush1.msra.mxu0 0.0
    %1008 = vmatprep.subr.mxu0 0.0
    %1009 = vmatpush1.msra.mxu0 0.0
    %1010 = vmatprep.subr.mxu0 0.0
    %1011 = vmatpush1.msra.mxu0 0.0
    %1012 = vmatprep.subr.mxu0 0.0
    %1013 = vmatpush1.msra.mxu0 0.0
    %1014 = vmatprep.subr.mxu0 0.0
    %1015 = vmatpush1.msra.mxu0 0.0
    %1016 = vmatprep.subr.mxu0 0.0
    %1017 = vmatpush1.msra.mxu0 0.0
    %1018 = vmatprep.subr.mxu0 0.0
    %1019 = vmatpush1.msra.mxu0 0.0
    %1020 = vmatprep.subr.mxu0 0.0
    %1021 = vmatpush1.msra.mxu0 0.0
    %1022 = vmatprep.mubr.f32.mxu0 0.0
    %1023 = vmatmul.mubr.f32.gmra.mrb[0].mxu0 %v798
    %v1024 = vpop.f32.mrb[0].mxu0
    %v1025 = vadd.f32 %v878, %v1024
    %v1026 = vpop.f32.mrb[0].mxu0
    %v1027 = vadd.f32 %v882, %v1026
    %1028 = vdwg.mxu0
    %v1029 = vxor.u32 %v954, 2147483648
    %v1030 = vmul.f32 %v1029, 1.442695
    %v1031 = vpow.pop %v1030
    %v1032 = vadd.f32 %v1031, 1.0
    %v1033 = vrcp.pop %v1032
    %v1034 = vmul.f32 1.0, %v1033
    %v1035 = vxor.u32 %v956, 2147483648
    %v1036 = vmul.f32 %v1035, 1.442695
    %v1037 = vpow.pop %v1036
    %v1038 = vadd.f32 %v1037, 1.0
    %v1039 = vrcp.pop %v1038
    %v1040 = vmul.f32 1.0, %v1039
    %v1041 = vtanh.pop %v1025
    %v1042 = vxor.u32 %v1027, 2147483648
    %v1043 = vmul.f32 %v1042, 1.442695
    %v1044 = vpow.pop %v1043
    %v1045 = vadd.f32 %v1044, 1.0
    %v1046 = vrcp.pop %v1045
    %v1047 = vmul.f32 1.0, %v1046
    %v1048 = vmul.f32 %v1040, %v796
    %v1049 = vmul.f32 %v1034, %v1041
    %v1050 = vadd.f32 %v1048, %v1049
    %v1051 = vtanh.pop %v1050
    %v1052 = vmul.f32 %v1047, %v1051
    %1053 = vst [vmem:[#allocation7 + $0x3] sm:$0x1] %v1052
    %s1054 = scalar_lea.vmem [#allocation2], 4
    %v1055 = vld [vmem:[%s1054] ss:$8 sm:$0xf]
    %v1056 = vld [vmem:[#allocation5] sm:$0xff]
    %v1057 = vld [vmem:[#allocation5 + $0x8] sm:$0xff]
    %v1058 = vld [vmem:[#allocation5 + $0x10] sm:$0xff]
    %v1059 = vld [vmem:[#allocation5 + $0x18] sm:$0xff]
    %v1060 = vld [vmem:[#allocation5 + $0x20] sm:$0xff]
    %v1061 = vld [vmem:[#allocation5 + $0x28] sm:$0xff]
    %v1062 = vld [vmem:[#allocation5 + $0x30] sm:$0xff]
    %v1063 = vld [vmem:[#allocation5 + $0x38] sm:$0xff]
    %v1064 = vld [vmem:[#allocation5 + $0x40] sm:$0xff]
    %v1065 = vld [vmem:[#allocation5 + $0x48] sm:$0xff]
    %v1066 = vld [vmem:[#allocation5 + $0x50] sm:$0xff]
    %v1067 = vld [vmem:[#allocation5 + $0x58] sm:$0xff]
    %v1068 = vld [vmem:[#allocation5 + $0x60] sm:$0xff]
    %v1069 = vld [vmem:[#allocation5 + $0x68] sm:$0xff]
    %v1070 = vld [vmem:[#allocation5 + $0x70] sm:$0xff]
    %v1071 = vld [vmem:[#allocation5 + $0x78] sm:$0xff]
    %v1072 = vld [vmem:[#allocation5 + $0x80] sm:$0xff]
    %v1073 = vld [vmem:[#allocation5 + $0x88] sm:$0xff]
    %v1074 = vld [vmem:[#allocation5 + $0x90] sm:$0xff]
    %v1075 = vld [vmem:[#allocation5 + $0x98] sm:$0xff]
    %v1076 = vld [vmem:[#allocation5 + $0xa0] sm:$0xff]
    %v1077 = vld [vmem:[#allocation5 + $0xa8] sm:$0xff]
    %v1078 = vld [vmem:[#allocation5 + $0xb0] sm:$0xff]
    %v1079 = vld [vmem:[#allocation5 + $0xb8] sm:$0xff]
    %v1080 = vld [vmem:[#allocation5 + $0xc0] sm:$0xff]
    %v1081 = vld [vmem:[#allocation5 + $0xc8] sm:$0xff]
    %v1082 = vld [vmem:[#allocation5 + $0xd0] sm:$0xff]
    %v1083 = vld [vmem:[#allocation5 + $0xd8] sm:$0xff]
    %v1084 = vld [vmem:[#allocation5 + $0xe0] sm:$0xff]
    %v1085 = vld [vmem:[#allocation5 + $0xe8] sm:$0xff]
    %v1086 = vld [vmem:[#allocation5 + $0xf0] sm:$0xff]
    %v1087 = vld [vmem:[#allocation5 + $0xf8] sm:$0xff]
    %v1088 = vld [vmem:[#allocation5 + $0x100] sm:$0xff]
    %v1089 = vld [vmem:[#allocation5 + $0x108] sm:$0xff]
    %v1090 = vld [vmem:[#allocation5 + $0x110] sm:$0xff]
    %v1091 = vld [vmem:[#allocation5 + $0x118] sm:$0xff]
    %v1092 = vld [vmem:[#allocation5 + $0x120] sm:$0xff]
    %v1093 = vld [vmem:[#allocation5 + $0x128] sm:$0xff]
    %v1094 = vld [vmem:[#allocation5 + $0x130] sm:$0xff]
    %v1095 = vld [vmem:[#allocation5 + $0x138] sm:$0xff]
    %v1096 = vld [vmem:[#allocation5 + $0x140] sm:$0xff]
    %v1097 = vld [vmem:[#allocation5 + $0x148] sm:$0xff]
    %v1098 = vld [vmem:[#allocation5 + $0x150] sm:$0xff]
    %v1099 = vld [vmem:[#allocation5 + $0x158] sm:$0xff]
    %v1100 = vld [vmem:[#allocation5 + $0x160] sm:$0xff]
    %v1101 = vld [vmem:[#allocation5 + $0x168] sm:$0xff]
    %v1102 = vld [vmem:[#allocation5 + $0x170] sm:$0xff]
    %v1103 = vld [vmem:[#allocation5 + $0x178] sm:$0xff]
    %v1104 = vld [vmem:[#allocation5 + $0x180] sm:$0xff]
    %v1105 = vld [vmem:[#allocation5 + $0x188] sm:$0xff]
    %v1106 = vld [vmem:[#allocation5 + $0x190] sm:$0xff]
    %v1107 = vld [vmem:[#allocation5 + $0x198] sm:$0xff]
    %v1108 = vld [vmem:[#allocation5 + $0x1a0] sm:$0xff]
    %v1109 = vld [vmem:[#allocation5 + $0x1a8] sm:$0xff]
    %v1110 = vld [vmem:[#allocation5 + $0x1b0] sm:$0xff]
    %v1111 = vld [vmem:[#allocation5 + $0x1b8] sm:$0xff]
    %v1112 = vld [vmem:[#allocation5 + $0x1c0] sm:$0xff]
    %v1113 = vld [vmem:[#allocation5 + $0x1c8] sm:$0xff]
    %v1114 = vld [vmem:[#allocation5 + $0x1d0] sm:$0xff]
    %v1115 = vld [vmem:[#allocation5 + $0x1d8] sm:$0xff]
    %v1116 = vld [vmem:[#allocation5 + $0x1e0] sm:$0xff]
    %v1117 = vld [vmem:[#allocation5 + $0x1e8] sm:$0xff]
    %v1118 = vld [vmem:[#allocation5 + $0x1f0] sm:$0xff]
    %v1119 = vld [vmem:[#allocation5 + $0x1f8] sm:$0xff]
    %v1121 = vlaneseq
    %v1122 = vshrl.u32 %v1121, 7
    %v1123 = vsub.s32 0, %v1122
    %v1124 = vrot.slane %v1055, %v1123
    %v1125 = vlaneseq
    %v1126 = vshrl.u32 %v1125, 7
    %v1127 = vsub.s32 1, %v1126
    %v1128 = vrot.slane %v1055, %v1127
    %v1129 = vlaneseq
    %v1130 = vshrl.u32 %v1129, 7
    %v1131 = vsub.s32 2, %v1130
    %v1132 = vrot.slane %v1055, %v1131
    %v1133 = vlaneseq
    %v1134 = vshrl.u32 %v1133, 7
    %v1135 = vsub.s32 3, %v1134
    %v1136 = vrot.slane %v1055, %v1135
    %1141 = vmatprep.subr.mxu0 %v1057
    %1142 = vmatpush1.msra.mxu0 %v1056
    %1143 = vmatprep.subr.mxu0 %v1061
    %1144 = vmatpush1.msra.mxu0 %v1060
    %1145 = vmatprep.subr.mxu0 %v1065
    %1146 = vmatpush1.msra.mxu0 %v1064
    %1147 = vmatprep.subr.mxu0 %v1069
    %1148 = vmatpush1.msra.mxu0 %v1068
    %1149 = vmatprep.subr.mxu0 %v1073
    %1150 = vmatpush1.msra.mxu0 %v1072
    %1151 = vmatprep.subr.mxu0 %v1077
    %1152 = vmatpush1.msra.mxu0 %v1076
    %1153 = vmatprep.subr.mxu0 %v1081
    %1154 = vmatpush1.msra.mxu0 %v1080
    %1155 = vmatprep.subr.mxu0 %v1085
    %1156 = vmatpush1.msra.mxu0 %v1084
    %1157 = vmatprep.subr.mxu0 %v1089
    %1158 = vmatpush1.msra.mxu0 %v1088
    %1159 = vmatprep.subr.mxu0 %v1093
    %1160 = vmatpush1.msra.mxu0 %v1092
    %1161 = vmatprep.subr.mxu0 %v1097
    %1162 = vmatpush1.msra.mxu0 %v1096
    %1163 = vmatprep.subr.mxu0 %v1101
    %1164 = vmatpush1.msra.mxu0 %v1100
    %1165 = vmatprep.subr.mxu0 %v1105
    %1166 = vmatpush1.msra.mxu0 %v1104
    %1167 = vmatprep.subr.mxu0 %v1109
    %1168 = vmatpush1.msra.mxu0 %v1108
    %1169 = vmatprep.subr.mxu0 %v1113
    %1170 = vmatpush1.msra.mxu0 %v1112
    %1171 = vmatprep.subr.mxu0 %v1117
    %1172 = vmatpush1.msra.mxu0 %v1116
    %1173 = vmatprep.subr.mxu0 0.0
    %1174 = vmatpush1.msra.mxu0 0.0
    %1175 = vmatprep.subr.mxu0 0.0
    %1176 = vmatpush1.msra.mxu0 0.0
    %1177 = vmatprep.subr.mxu0 0.0
    %1178 = vmatpush1.msra.mxu0 0.0
    %1179 = vmatprep.subr.mxu0 0.0
    %1180 = vmatpush1.msra.mxu0 0.0
    %1181 = vmatprep.subr.mxu0 0.0
    %1182 = vmatpush1.msra.mxu0 0.0
    %1183 = vmatprep.subr.mxu0 0.0
    %1184 = vmatpush1.msra.mxu0 0.0
    %1185 = vmatprep.subr.mxu0 0.0
    %1186 = vmatpush1.msra.mxu0 0.0
    %1187 = vmatprep.subr.mxu0 0.0
    %1188 = vmatpush1.msra.mxu0 0.0
    %1189 = vmatprep.subr.mxu0 0.0
    %1190 = vmatpush1.msra.mxu0 0.0
    %1191 = vmatprep.subr.mxu0 0.0
    %1192 = vmatpush1.msra.mxu0 0.0
    %1193 = vmatprep.subr.mxu0 0.0
    %1194 = vmatpush1.msra.mxu0 0.0
    %1195 = vmatprep.subr.mxu0 0.0
    %1196 = vmatpush1.msra.mxu0 0.0
    %1197 = vmatprep.subr.mxu0 0.0
    %1198 = vmatpush1.msra.mxu0 0.0
    %1199 = vmatprep.subr.mxu0 0.0
    %1200 = vmatpush1.msra.mxu0 0.0
    %1201 = vmatprep.subr.mxu0 0.0
    %1202 = vmatpush1.msra.mxu0 0.0
    %1203 = vmatprep.subr.mxu0 0.0
    %1204 = vmatpush1.msra.mxu0 0.0
    %1205 = vmatprep.mubr.f32.mxu0 0.0
    %1206 = vmatmul.mubr.f32.gmra.mrb[0].mxu0 %v1052
    %v1207 = vpop.f32.mrb[0].mxu0
    %v1208 = vadd.f32 %v1124, %v1207
    %v1209 = vpop.f32.mrb[0].mxu0
    %v1210 = vadd.f32 %v1128, %v1209
    %1211 = vdwg.mxu0
    %1212 = vmatprep.subr.mxu0 %v1059
    %1213 = vmatpush1.msra.mxu0 %v1058
    %1214 = vmatprep.subr.mxu0 %v1063
    %1215 = vmatpush1.msra.mxu0 %v1062
    %1216 = vmatprep.subr.mxu0 %v1067
    %1217 = vmatpush1.msra.mxu0 %v1066
    %1218 = vmatprep.subr.mxu0 %v1071
    %1219 = vmatpush1.msra.mxu0 %v1070
    %1220 = vmatprep.subr.mxu0 %v1075
    %1221 = vmatpush1.msra.mxu0 %v1074
    %1222 = vmatprep.subr.mxu0 %v1079
    %1223 = vmatpush1.msra.mxu0 %v1078
    %1224 = vmatprep.subr.mxu0 %v1083
    %1225 = vmatpush1.msra.mxu0 %v1082
    %1226 = vmatprep.subr.mxu0 %v1087
    %1227 = vmatpush1.msra.mxu0 %v1086
    %1228 = vmatprep.subr.mxu0 %v1091
    %1229 = vmatpush1.msra.mxu0 %v1090
    %1230 = vmatprep.subr.mxu0 %v1095
    %1231 = vmatpush1.msra.mxu0 %v1094
    %1232 = vmatprep.subr.mxu0 %v1099
    %1233 = vmatpush1.msra.mxu0 %v1098
    %1234 = vmatprep.subr.mxu0 %v1103
    %1235 = vmatpush1.msra.mxu0 %v1102
    %1236 = vmatprep.subr.mxu0 %v1107
    %1237 = vmatpush1.msra.mxu0 %v1106
    %1238 = vmatprep.subr.mxu0 %v1111
    %1239 = vmatpush1.msra.mxu0 %v1110
    %1240 = vmatprep.subr.mxu0 %v1115
    %1241 = vmatpush1.msra.mxu0 %v1114
    %1242 = vmatprep.subr.mxu0 %v1119
    %1243 = vmatpush1.msra.mxu0 %v1118
    %1244 = vmatprep.subr.mxu0 0.0
    %1245 = vmatpush1.msra.mxu0 0.0
    %1246 = vmatprep.subr.mxu0 0.0
    %1247 = vmatpush1.msra.mxu0 0.0
    %1248 = vmatprep.subr.mxu0 0.0
    %1249 = vmatpush1.msra.mxu0 0.0
    %1250 = vmatprep.subr.mxu0 0.0
    %1251 = vmatpush1.msra.mxu0 0.0
    %1252 = vmatprep.subr.mxu0 0.0
    %1253 = vmatpush1.msra.mxu0 0.0
    %1254 = vmatprep.subr.mxu0 0.0
    %1255 = vmatpush1.msra.mxu0 0.0
    %1256 = vmatprep.subr.mxu0 0.0
    %1257 = vmatpush1.msra.mxu0 0.0
    %1258 = vmatprep.subr.mxu0 0.0
    %1259 = vmatpush1.msra.mxu0 0.0
    %1260 = vmatprep.subr.mxu0 0.0
    %1261 = vmatpush1.msra.mxu0 0.0
    %1262 = vmatprep.subr.mxu0 0.0
    %1263 = vmatpush1.msra.mxu0 0.0
    %1264 = vmatprep.subr.mxu0 0.0
    %1265 = vmatpush1.msra.mxu0 0.0
    %1266 = vmatprep.subr.mxu0 0.0
    %1267 = vmatpush1.msra.mxu0 0.0
    %1268 = vmatprep.subr.mxu0 0.0
    %1269 = vmatpush1.msra.mxu0 0.0
    %1270 = vmatprep.subr.mxu0 0.0
    %1271 = vmatpush1.msra.mxu0 0.0
    %1272 = vmatprep.subr.mxu0 0.0
    %1273 = vmatpush1.msra.mxu0 0.0
    %1274 = vmatprep.subr.mxu0 0.0
    %1275 = vmatpush1.msra.mxu0 0.0
    %1276 = vmatprep.mubr.f32.mxu0 0.0
    %1277 = vmatmul.mubr.f32.gmra.mrb[0].mxu0 %v1052
    %v1278 = vpop.f32.mrb[0].mxu0
    %v1279 = vadd.f32 %v1132, %v1278
    %v1280 = vpop.f32.mrb[0].mxu0
    %v1281 = vadd.f32 %v1136, %v1280
    %1282 = vdwg.mxu0
    %v1283 = vxor.u32 %v1208, 2147483648
    %v1284 = vmul.f32 %v1283, 1.442695
    %v1285 = vpow.pop %v1284
    %v1286 = vadd.f32 %v1285, 1.0
    %v1287 = vrcp.pop %v1286
    %v1288 = vmul.f32 1.0, %v1287
    %v1289 = vxor.u32 %v1210, 2147483648
    %v1290 = vmul.f32 %v1289, 1.442695
    %v1291 = vpow.pop %v1290
    %v1292 = vadd.f32 %v1291, 1.0
    %v1293 = vrcp.pop %v1292
    %v1294 = vmul.f32 1.0, %v1293
    %v1295 = vtanh.pop %v1279
    %v1296 = vxor.u32 %v1281, 2147483648
    %v1297 = vmul.f32 %v1296, 1.442695
    %v1298 = vpow.pop %v1297
    %v1299 = vadd.f32 %v1298, 1.0
    %v1300 = vrcp.pop %v1299
    %v1301 = vmul.f32 1.0, %v1300
    %v1302 = vmul.f32 %v1294, %v1050
    %v1303 = vmul.f32 %v1288, %v1295
    %v1304 = vadd.f32 %v1302, %v1303
    %v1305 = vtanh.pop %v1304
    %v1306 = vmul.f32 %v1301, %v1305
    %1307 = vst [vmem:[#allocation7 + $0x4] sm:$0x1] %v1306
    %s1308 = scalar_lea.vmem [#allocation2], 5
    %v1309 = vld [vmem:[%s1308] ss:$8 sm:$0xf]
    %v1310 = vld [vmem:[#allocation5] sm:$0xff]
    %v1311 = vld [vmem:[#allocation5 + $0x8] sm:$0xff]
    %v1312 = vld [vmem:[#allocation5 + $0x10] sm:$0xff]
    %v1313 = vld [vmem:[#allocation5 + $0x18] sm:$0xff]
    %v1314 = vld [vmem:[#allocation5 + $0x20] sm:$0xff]
    %v1315 = vld [vmem:[#allocation5 + $0x28] sm:$0xff]
    %v1316 = vld [vmem:[#allocation5 + $0x30] sm:$0xff]
    %v1317 = vld [vmem:[#allocation5 + $0x38] sm:$0xff]
    %v1318 = vld [vmem:[#allocation5 + $0x40] sm:$0xff]
    %v1319 = vld [vmem:[#allocation5 + $0x48] sm:$0xff]
    %v1320 = vld [vmem:[#allocation5 + $0x50] sm:$0xff]
    %v1321 = vld [vmem:[#allocation5 + $0x58] sm:$0xff]
    %v1322 = vld [vmem:[#allocation5 + $0x60] sm:$0xff]
    %v1323 = vld [vmem:[#allocation5 + $0x68] sm:$0xff]
    %v1324 = vld [vmem:[#allocation5 + $0x70] sm:$0xff]
    %v1325 = vld [vmem:[#allocation5 + $0x78] sm:$0xff]
    %v1326 = vld [vmem:[#allocation5 + $0x80] sm:$0xff]
    %v1327 = vld [vmem:[#allocation5 + $0x88] sm:$0xff]
    %v1328 = vld [vmem:[#allocation5 + $0x90] sm:$0xff]
    %v1329 = vld [vmem:[#allocation5 + $0x98] sm:$0xff]
    %v1330 = vld [vmem:[#allocation5 + $0xa0] sm:$0xff]
    %v1331 = vld [vmem:[#allocation5 + $0xa8] sm:$0xff]
    %v1332 = vld [vmem:[#allocation5 + $0xb0] sm:$0xff]
    %v1333 = vld [vmem:[#allocation5 + $0xb8] sm:$0xff]
    %v1334 = vld [vmem:[#allocation5 + $0xc0] sm:$0xff]
    %v1335 = vld [vmem:[#allocation5 + $0xc8] sm:$0xff]
    %v1336 = vld [vmem:[#allocation5 + $0xd0] sm:$0xff]
    %v1337 = vld [vmem:[#allocation5 + $0xd8] sm:$0xff]
    %v1338 = vld [vmem:[#allocation5 + $0xe0] sm:$0xff]
    %v1339 = vld [vmem:[#allocation5 + $0xe8] sm:$0xff]
    %v1340 = vld [vmem:[#allocation5 + $0xf0] sm:$0xff]
    %v1341 = vld [vmem:[#allocation5 + $0xf8] sm:$0xff]
    %v1342 = vld [vmem:[#allocation5 + $0x100] sm:$0xff]
    %v1343 = vld [vmem:[#allocation5 + $0x108] sm:$0xff]
    %v1344 = vld [vmem:[#allocation5 + $0x110] sm:$0xff]
    %v1345 = vld [vmem:[#allocation5 + $0x118] sm:$0xff]
    %v1346 = vld [vmem:[#allocation5 + $0x120] sm:$0xff]
    %v1347 = vld [vmem:[#allocation5 + $0x128] sm:$0xff]
    %v1348 = vld [vmem:[#allocation5 + $0x130] sm:$0xff]
    %v1349 = vld [vmem:[#allocation5 + $0x138] sm:$0xff]
    %v1350 = vld [vmem:[#allocation5 + $0x140] sm:$0xff]
    %v1351 = vld [vmem:[#allocation5 + $0x148] sm:$0xff]
    %v1352 = vld [vmem:[#allocation5 + $0x150] sm:$0xff]
    %v1353 = vld [vmem:[#allocation5 + $0x158] sm:$0xff]
    %v1354 = vld [vmem:[#allocation5 + $0x160] sm:$0xff]
    %v1355 = vld [vmem:[#allocation5 + $0x168] sm:$0xff]
    %v1356 = vld [vmem:[#allocation5 + $0x170] sm:$0xff]
    %v1357 = vld [vmem:[#allocation5 + $0x178] sm:$0xff]
    %v1358 = vld [vmem:[#allocation5 + $0x180] sm:$0xff]
    %v1359 = vld [vmem:[#allocation5 + $0x188] sm:$0xff]
    %v1360 = vld [vmem:[#allocation5 + $0x190] sm:$0xff]
    %v1361 = vld [vmem:[#allocation5 + $0x198] sm:$0xff]
    %v1362 = vld [vmem:[#allocation5 + $0x1a0] sm:$0xff]
    %v1363 = vld [vmem:[#allocation5 + $0x1a8] sm:$0xff]
    %v1364 = vld [vmem:[#allocation5 + $0x1b0] sm:$0xff]
    %v1365 = vld [vmem:[#allocation5 + $0x1b8] sm:$0xff]
    %v1366 = vld [vmem:[#allocation5 + $0x1c0] sm:$0xff]
    %v1367 = vld [vmem:[#allocation5 + $0x1c8] sm:$0xff]
    %v1368 = vld [vmem:[#allocation5 + $0x1d0] sm:$0xff]
    %v1369 = vld [vmem:[#allocation5 + $0x1d8] sm:$0xff]
    %v1370 = vld [vmem:[#allocation5 + $0x1e0] sm:$0xff]
    %v1371 = vld [vmem:[#allocation5 + $0x1e8] sm:$0xff]
    %v1372 = vld [vmem:[#allocation5 + $0x1f0] sm:$0xff]
    %v1373 = vld [vmem:[#allocation5 + $0x1f8] sm:$0xff]
    %v1375 = vlaneseq
    %v1376 = vshrl.u32 %v1375, 7
    %v1377 = vsub.s32 0, %v1376
    %v1378 = vrot.slane %v1309, %v1377
    %v1379 = vlaneseq
    %v1380 = vshrl.u32 %v1379, 7
    %v1381 = vsub.s32 1, %v1380
    %v1382 = vrot.slane %v1309, %v1381
    %v1383 = vlaneseq
    %v1384 = vshrl.u32 %v1383, 7
    %v1385 = vsub.s32 2, %v1384
    %v1386 = vrot.slane %v1309, %v1385
    %v1387 = vlaneseq
    %v1388 = vshrl.u32 %v1387, 7
    %v1389 = vsub.s32 3, %v1388
    %v1390 = vrot.slane %v1309, %v1389
    %1395 = vmatprep.subr.mxu0 %v1311
    %1396 = vmatpush1.msra.mxu0 %v1310
    %1397 = vmatprep.subr.mxu0 %v1315
    %1398 = vmatpush1.msra.mxu0 %v1314
    %1399 = vmatprep.subr.mxu0 %v1319
    %1400 = vmatpush1.msra.mxu0 %v1318
    %1401 = vmatprep.subr.mxu0 %v1323
    %1402 = vmatpush1.msra.mxu0 %v1322
    %1403 = vmatprep.subr.mxu0 %v1327
    %1404 = vmatpush1.msra.mxu0 %v1326
    %1405 = vmatprep.subr.mxu0 %v1331
    %1406 = vmatpush1.msra.mxu0 %v1330
    %1407 = vmatprep.subr.mxu0 %v1335
    %1408 = vmatpush1.msra.mxu0 %v1334
    %1409 = vmatprep.subr.mxu0 %v1339
    %1410 = vmatpush1.msra.mxu0 %v1338
    %1411 = vmatprep.subr.mxu0 %v1343
    %1412 = vmatpush1.msra.mxu0 %v1342
    %1413 = vmatprep.subr.mxu0 %v1347
    %1414 = vmatpush1.msra.mxu0 %v1346
    %1415 = vmatprep.subr.mxu0 %v1351
    %1416 = vmatpush1.msra.mxu0 %v1350
    %1417 = vmatprep.subr.mxu0 %v1355
    %1418 = vmatpush1.msra.mxu0 %v1354
    %1419 = vmatprep.subr.mxu0 %v1359
    %1420 = vmatpush1.msra.mxu0 %v1358
    %1421 = vmatprep.subr.mxu0 %v1363
    %1422 = vmatpush1.msra.mxu0 %v1362
    %1423 = vmatprep.subr.mxu0 %v1367
    %1424 = vmatpush1.msra.mxu0 %v1366
    %1425 = vmatprep.subr.mxu0 %v1371
    %1426 = vmatpush1.msra.mxu0 %v1370
    %1427 = vmatprep.subr.mxu0 0.0
    %1428 = vmatpush1.msra.mxu0 0.0
    %1429 = vmatprep.subr.mxu0 0.0
    %1430 = vmatpush1.msra.mxu0 0.0
    %1431 = vmatprep.subr.mxu0 0.0
    %1432 = vmatpush1.msra.mxu0 0.0
    %1433 = vmatprep.subr.mxu0 0.0
    %1434 = vmatpush1.msra.mxu0 0.0
    %1435 = vmatprep.subr.mxu0 0.0
    %1436 = vmatpush1.msra.mxu0 0.0
    %1437 = vmatprep.subr.mxu0 0.0
    %1438 = vmatpush1.msra.mxu0 0.0
    %1439 = vmatprep.subr.mxu0 0.0
    %1440 = vmatpush1.msra.mxu0 0.0
    %1441 = vmatprep.subr.mxu0 0.0
    %1442 = vmatpush1.msra.mxu0 0.0
    %1443 = vmatprep.subr.mxu0 0.0
    %1444 = vmatpush1.msra.mxu0 0.0
    %1445 = vmatprep.subr.mxu0 0.0
    %1446 = vmatpush1.msra.mxu0 0.0
    %1447 = vmatprep.subr.mxu0 0.0
    %1448 = vmatpush1.msra.mxu0 0.0
    %1449 = vmatprep.subr.mxu0 0.0
    %1450 = vmatpush1.msra.mxu0 0.0
    %1451 = vmatprep.subr.mxu0 0.0
    %1452 = vmatpush1.msra.mxu0 0.0
    %1453 = vmatprep.subr.mxu0 0.0
    %1454 = vmatpush1.msra.mxu0 0.0
    %1455 = vmatprep.subr.mxu0 0.0
    %1456 = vmatpush1.msra.mxu0 0.0
    %1457 = vmatprep.subr.mxu0 0.0
    %1458 = vmatpush1.msra.mxu0 0.0
    %1459 = vmatprep.mubr.f32.mxu0 0.0
    %1460 = vmatmul.mubr.f32.gmra.mrb[0].mxu0 %v1306
    %v1461 = vpop.f32.mrb[0].mxu0
    %v1462 = vadd.f32 %v1378, %v1461
    %v1463 = vpop.f32.mrb[0].mxu0
    %v1464 = vadd.f32 %v1382, %v1463
    %1465 = vdwg.mxu0
    %1466 = vmatprep.subr.mxu0 %v1313
    %1467 = vmatpush1.msra.mxu0 %v1312
    %1468 = vmatprep.subr.mxu0 %v1317
    %1469 = vmatpush1.msra.mxu0 %v1316
    %1470 = vmatprep.subr.mxu0 %v1321
    %1471 = vmatpush1.msra.mxu0 %v1320
    %1472 = vmatprep.subr.mxu0 %v1325
    %1473 = vmatpush1.msra.mxu0 %v1324
    %1474 = vmatprep.subr.mxu0 %v1329
    %1475 = vmatpush1.msra.mxu0 %v1328
    %1476 = vmatprep.subr.mxu0 %v1333
    %1477 = vmatpush1.msra.mxu0 %v1332
    %1478 = vmatprep.subr.mxu0 %v1337
    %1479 = vmatpush1.msra.mxu0 %v1336
    %1480 = vmatprep.subr.mxu0 %v1341
    %1481 = vmatpush1.msra.mxu0 %v1340
    %1482 = vmatprep.subr.mxu0 %v1345
    %1483 = vmatpush1.msra.mxu0 %v1344
    %1484 = vmatprep.subr.mxu0 %v1349
    %1485 = vmatpush1.msra.mxu0 %v1348
    %1486 = vmatprep.subr.mxu0 %v1353
    %1487 = vmatpush1.msra.mxu0 %v1352
    %1488 = vmatprep.subr.mxu0 %v1357
    %1489 = vmatpush1.msra.mxu0 %v1356
    %1490 = vmatprep.subr.mxu0 %v1361
    %1491 = vmatpush1.msra.mxu0 %v1360
    %1492 = vmatprep.subr.mxu0 %v1365
    %1493 = vmatpush1.msra.mxu0 %v1364
    %1494 = vmatprep.subr.mxu0 %v1369
    %1495 = vmatpush1.msra.mxu0 %v1368
    %1496 = vmatprep.subr.mxu0 %v1373
    %1497 = vmatpush1.msra.mxu0 %v1372
    %1498 = vmatprep.subr.mxu0 0.0
    %1499 = vmatpush1.msra.mxu0 0.0
    %1500 = vmatprep.subr.mxu0 0.0
    %1501 = vmatpush1.msra.mxu0 0.0
    %1502 = vmatprep.subr.mxu0 0.0
    %1503 = vmatpush1.msra.mxu0 0.0
    %1504 = vmatprep.subr.mxu0 0.0
    %1505 = vmatpush1.msra.mxu0 0.0
    %1506 = vmatprep.subr.mxu0 0.0
    %1507 = vmatpush1.msra.mxu0 0.0
    %1508 = vmatprep.subr.mxu0 0.0
    %1509 = vmatpush1.msra.mxu0 0.0
    %1510 = vmatprep.subr.mxu0 0.0
    %1511 = vmatpush1.msra.mxu0 0.0
    %1512 = vmatprep.subr.mxu0 0.0
    %1513 = vmatpush1.msra.mxu0 0.0
    %1514 = vmatprep.subr.mxu0 0.0
    %1515 = vmatpush1.msra.mxu0 0.0
    %1516 = vmatprep.subr.mxu0 0.0
    %1517 = vmatpush1.msra.mxu0 0.0
    %1518 = vmatprep.subr.mxu0 0.0
    %1519 = vmatpush1.msra.mxu0 0.0
    %1520 = vmatprep.subr.mxu0 0.0
    %1521 = vmatpush1.msra.mxu0 0.0
    %1522 = vmatprep.subr.mxu0 0.0
    %1523 = vmatpush1.msra.mxu0 0.0
    %1524 = vmatprep.subr.mxu0 0.0
    %1525 = vmatpush1.msra.mxu0 0.0
    %1526 = vmatprep.subr.mxu0 0.0
    %1527 = vmatpush1.msra.mxu0 0.0
    %1528 = vmatprep.subr.mxu0 0.0
    %1529 = vmatpush1.msra.mxu0 0.0
    %1530 = vmatprep.mubr.f32.mxu0 0.0
    %1531 = vmatmul.mubr.f32.gmra.mrb[0].mxu0 %v1306
    %v1532 = vpop.f32.mrb[0].mxu0
    %v1533 = vadd.f32 %v1386, %v1532
    %v1534 = vpop.f32.mrb[0].mxu0
    %v1535 = vadd.f32 %v1390, %v1534
    %1536 = vdwg.mxu0
    %v1537 = vxor.u32 %v1462, 2147483648
    %v1538 = vmul.f32 %v1537, 1.442695
    %v1539 = vpow.pop %v1538
    %v1540 = vadd.f32 %v1539, 1.0
    %v1541 = vrcp.pop %v1540
    %v1542 = vmul.f32 1.0, %v1541
    %v1543 = vxor.u32 %v1464, 2147483648
    %v1544 = vmul.f32 %v1543, 1.442695
    %v1545 = vpow.pop %v1544
    %v1546 = vadd.f32 %v1545, 1.0
    %v1547 = vrcp.pop %v1546
    %v1548 = vmul.f32 1.0, %v1547
    %v1549 = vtanh.pop %v1533
    %v1550 = vxor.u32 %v1535, 2147483648
    %v1551 = vmul.f32 %v1550, 1.442695
    %v1552 = vpow.pop %v1551
    %v1553 = vadd.f32 %v1552, 1.0
    %v1554 = vrcp.pop %v1553
    %v1555 = vmul.f32 1.0, %v1554
    %v1556 = vmul.f32 %v1548, %v1304
    %v1557 = vmul.f32 %v1542, %v1549
    %v1558 = vadd.f32 %v1556, %v1557
    %v1559 = vtanh.pop %v1558
    %v1560 = vmul.f32 %v1555, %v1559
    %1561 = vst [vmem:[#allocation7 + $0x5] sm:$0x1] %v1560
    %s1562 = scalar_lea.vmem [#allocation2], 6
    %v1563 = vld [vmem:[%s1562] ss:$8 sm:$0xf]
    %v1564 = vld [vmem:[#allocation5] sm:$0xff]
    %v1565 = vld [vmem:[#allocation5 + $0x8] sm:$0xff]
    %v1566 = vld [vmem:[#allocation5 + $0x10] sm:$0xff]
    %v1567 = vld [vmem:[#allocation5 + $0x18] sm:$0xff]
    %v1568 = vld [vmem:[#allocation5 + $0x20] sm:$0xff]
    %v1569 = vld [vmem:[#allocation5 + $0x28] sm:$0xff]
    %v1570 = vld [vmem:[#allocation5 + $0x30] sm:$0xff]
    %v1571 = vld [vmem:[#allocation5 + $0x38] sm:$0xff]
    %v1572 = vld [vmem:[#allocation5 + $0x40] sm:$0xff]
    %v1573 = vld [vmem:[#allocation5 + $0x48] sm:$0xff]
    %v1574 = vld [vmem:[#allocation5 + $0x50] sm:$0xff]
    %v1575 = vld [vmem:[#allocation5 + $0x58] sm:$0xff]
    %v1576 = vld [vmem:[#allocation5 + $0x60] sm:$0xff]
    %v1577 = vld [vmem:[#allocation5 + $0x68] sm:$0xff]
    %v1578 = vld [vmem:[#allocation5 + $0x70] sm:$0xff]
    %v1579 = vld [vmem:[#allocation5 + $0x78] sm:$0xff]
    %v1580 = vld [vmem:[#allocation5 + $0x80] sm:$0xff]
    %v1581 = vld [vmem:[#allocation5 + $0x88] sm:$0xff]
    %v1582 = vld [vmem:[#allocation5 + $0x90] sm:$0xff]
    %v1583 = vld [vmem:[#allocation5 + $0x98] sm:$0xff]
    %v1584 = vld [vmem:[#allocation5 + $0xa0] sm:$0xff]
    %v1585 = vld [vmem:[#allocation5 + $0xa8] sm:$0xff]
    %v1586 = vld [vmem:[#allocation5 + $0xb0] sm:$0xff]
    %v1587 = vld [vmem:[#allocation5 + $0xb8] sm:$0xff]
    %v1588 = vld [vmem:[#allocation5 + $0xc0] sm:$0xff]
    %v1589 = vld [vmem:[#allocation5 + $0xc8] sm:$0xff]
    %v1590 = vld [vmem:[#allocation5 + $0xd0] sm:$0xff]
    %v1591 = vld [vmem:[#allocation5 + $0xd8] sm:$0xff]
    %v1592 = vld [vmem:[#allocation5 + $0xe0] sm:$0xff]
    %v1593 = vld [vmem:[#allocation5 + $0xe8] sm:$0xff]
    %v1594 = vld [vmem:[#allocation5 + $0xf0] sm:$0xff]
    %v1595 = vld [vmem:[#allocation5 + $0xf8] sm:$0xff]
    %v1596 = vld [vmem:[#allocation5 + $0x100] sm:$0xff]
    %v1597 = vld [vmem:[#allocation5 + $0x108] sm:$0xff]
    %v1598 = vld [vmem:[#allocation5 + $0x110] sm:$0xff]
    %v1599 = vld [vmem:[#allocation5 + $0x118] sm:$0xff]
    %v1600 = vld [vmem:[#allocation5 + $0x120] sm:$0xff]
    %v1601 = vld [vmem:[#allocation5 + $0x128] sm:$0xff]
    %v1602 = vld [vmem:[#allocation5 + $0x130] sm:$0xff]
    %v1603 = vld [vmem:[#allocation5 + $0x138] sm:$0xff]
    %v1604 = vld [vmem:[#allocation5 + $0x140] sm:$0xff]
    %v1605 = vld [vmem:[#allocation5 + $0x148] sm:$0xff]
    %v1606 = vld [vmem:[#allocation5 + $0x150] sm:$0xff]
    %v1607 = vld [vmem:[#allocation5 + $0x158] sm:$0xff]
    %v1608 = vld [vmem:[#allocation5 + $0x160] sm:$0xff]
    %v1609 = vld [vmem:[#allocation5 + $0x168] sm:$0xff]
    %v1610 = vld [vmem:[#allocation5 + $0x170] sm:$0xff]
    %v1611 = vld [vmem:[#allocation5 + $0x178] sm:$0xff]
    %v1612 = vld [vmem:[#allocation5 + $0x180] sm:$0xff]
    %v1613 = vld [vmem:[#allocation5 + $0x188] sm:$0xff]
    %v1614 = vld [vmem:[#allocation5 + $0x190] sm:$0xff]
    %v1615 = vld [vmem:[#allocation5 + $0x198] sm:$0xff]
    %v1616 = vld [vmem:[#allocation5 + $0x1a0] sm:$0xff]
    %v1617 = vld [vmem:[#allocation5 + $0x1a8] sm:$0xff]
    %v1618 = vld [vmem:[#allocation5 + $0x1b0] sm:$0xff]
    %v1619 = vld [vmem:[#allocation5 + $0x1b8] sm:$0xff]
    %v1620 = vld [vmem:[#allocation5 + $0x1c0] sm:$0xff]
    %v1621 = vld [vmem:[#allocation5 + $0x1c8] sm:$0xff]
    %v1622 = vld [vmem:[#allocation5 + $0x1d0] sm:$0xff]
    %v1623 = vld [vmem:[#allocation5 + $0x1d8] sm:$0xff]
    %v1624 = vld [vmem:[#allocation5 + $0x1e0] sm:$0xff]
    %v1625 = vld [vmem:[#allocation5 + $0x1e8] sm:$0xff]
    %v1626 = vld [vmem:[#allocation5 + $0x1f0] sm:$0xff]
    %v1627 = vld [vmem:[#allocation5 + $0x1f8] sm:$0xff]
    %v1629 = vlaneseq
    %v1630 = vshrl.u32 %v1629, 7
    %v1631 = vsub.s32 0, %v1630
    %v1632 = vrot.slane %v1563, %v1631
    %v1633 = vlaneseq
    %v1634 = vshrl.u32 %v1633, 7
    %v1635 = vsub.s32 1, %v1634
    %v1636 = vrot.slane %v1563, %v1635
    %v1637 = vlaneseq
    %v1638 = vshrl.u32 %v1637, 7
    %v1639 = vsub.s32 2, %v1638
    %v1640 = vrot.slane %v1563, %v1639
    %v1641 = vlaneseq
    %v1642 = vshrl.u32 %v1641, 7
    %v1643 = vsub.s32 3, %v1642
    %v1644 = vrot.slane %v1563, %v1643
    %1649 = vmatprep.subr.mxu0 %v1565
    %1650 = vmatpush1.msra.mxu0 %v1564
    %1651 = vmatprep.subr.mxu0 %v1569
    %1652 = vmatpush1.msra.mxu0 %v1568
    %1653 = vmatprep.subr.mxu0 %v1573
    %1654 = vmatpush1.msra.mxu0 %v1572
    %1655 = vmatprep.subr.mxu0 %v1577
    %1656 = vmatpush1.msra.mxu0 %v1576
    %1657 = vmatprep.subr.mxu0 %v1581
    %1658 = vmatpush1.msra.mxu0 %v1580
    %1659 = vmatprep.subr.mxu0 %v1585
    %1660 = vmatpush1.msra.mxu0 %v1584
    %1661 = vmatprep.subr.mxu0 %v1589
    %1662 = vmatpush1.msra.mxu0 %v1588
    %1663 = vmatprep.subr.mxu0 %v1593
    %1664 = vmatpush1.msra.mxu0 %v1592
    %1665 = vmatprep.subr.mxu0 %v1597
    %1666 = vmatpush1.msra.mxu0 %v1596
    %1667 = vmatprep.subr.mxu0 %v1601
    %1668 = vmatpush1.msra.mxu0 %v1600
    %1669 = vmatprep.subr.mxu0 %v1605
    %1670 = vmatpush1.msra.mxu0 %v1604
    %1671 = vmatprep.subr.mxu0 %v1609
    %1672 = vmatpush1.msra.mxu0 %v1608
    %1673 = vmatprep.subr.mxu0 %v1613
    %1674 = vmatpush1.msra.mxu0 %v1612
    %1675 = vmatprep.subr.mxu0 %v1617
    %1676 = vmatpush1.msra.mxu0 %v1616
    %1677 = vmatprep.subr.mxu0 %v1621
    %1678 = vmatpush1.msra.mxu0 %v1620
    %1679 = vmatprep.subr.mxu0 %v1625
    %1680 = vmatpush1.msra.mxu0 %v1624
    %1681 = vmatprep.subr.mxu0 0.0
    %1682 = vmatpush1.msra.mxu0 0.0
    %1683 = vmatprep.subr.mxu0 0.0
    %1684 = vmatpush1.msra.mxu0 0.0
    %1685 = vmatprep.subr.mxu0 0.0
    %1686 = vmatpush1.msra.mxu0 0.0
    %1687 = vmatprep.subr.mxu0 0.0
    %1688 = vmatpush1.msra.mxu0 0.0
    %1689 = vmatprep.subr.mxu0 0.0
    %1690 = vmatpush1.msra.mxu0 0.0
    %1691 = vmatprep.subr.mxu0 0.0
    %1692 = vmatpush1.msra.mxu0 0.0
    %1693 = vmatprep.subr.mxu0 0.0
    %1694 = vmatpush1.msra.mxu0 0.0
    %1695 = vmatprep.subr.mxu0 0.0
    %1696 = vmatpush1.msra.mxu0 0.0
    %1697 = vmatprep.subr.mxu0 0.0
    %1698 = vmatpush1.msra.mxu0 0.0
    %1699 = vmatprep.subr.mxu0 0.0
    %1700 = vmatpush1.msra.mxu0 0.0
    %1701 = vmatprep.subr.mxu0 0.0
    %1702 = vmatpush1.msra.mxu0 0.0
    %1703 = vmatprep.subr.mxu0 0.0
    %1704 = vmatpush1.msra.mxu0 0.0
    %1705 = vmatprep.subr.mxu0 0.0
    %1706 = vmatpush1.msra.mxu0 0.0
    %1707 = vmatprep.subr.mxu0 0.0
    %1708 = vmatpush1.msra.mxu0 0.0
    %1709 = vmatprep.subr.mxu0 0.0
    %1710 = vmatpush1.msra.mxu0 0.0
    %1711 = vmatprep.subr.mxu0 0.0
    %1712 = vmatpush1.msra.mxu0 0.0
    %1713 = vmatprep.mubr.f32.mxu0 0.0
    %1714 = vmatmul.mubr.f32.gmra.mrb[0].mxu0 %v1560
    %v1715 = vpop.f32.mrb[0].mxu0
    %v1716 = vadd.f32 %v1632, %v1715
    %v1717 = vpop.f32.mrb[0].mxu0
    %v1718 = vadd.f32 %v1636, %v1717
    %1719 = vdwg.mxu0
    %1720 = vmatprep.subr.mxu0 %v1567
    %1721 = vmatpush1.msra.mxu0 %v1566
    %1722 = vmatprep.subr.mxu0 %v1571
    %1723 = vmatpush1.msra.mxu0 %v1570
    %1724 = vmatprep.subr.mxu0 %v1575
    %1725 = vmatpush1.msra.mxu0 %v1574
    %1726 = vmatprep.subr.mxu0 %v1579
    %1727 = vmatpush1.msra.mxu0 %v1578
    %1728 = vmatprep.subr.mxu0 %v1583
    %1729 = vmatpush1.msra.mxu0 %v1582
    %1730 = vmatprep.subr.mxu0 %v1587
    %1731 = vmatpush1.msra.mxu0 %v1586
    %1732 = vmatprep.subr.mxu0 %v1591
    %1733 = vmatpush1.msra.mxu0 %v1590
    %1734 = vmatprep.subr.mxu0 %v1595
    %1735 = vmatpush1.msra.mxu0 %v1594
    %1736 = vmatprep.subr.mxu0 %v1599
    %1737 = vmatpush1.msra.mxu0 %v1598
    %1738 = vmatprep.subr.mxu0 %v1603
    %1739 = vmatpush1.msra.mxu0 %v1602
    %1740 = vmatprep.subr.mxu0 %v1607
    %1741 = vmatpush1.msra.mxu0 %v1606
    %1742 = vmatprep.subr.mxu0 %v1611
    %1743 = vmatpush1.msra.mxu0 %v1610
    %1744 = vmatprep.subr.mxu0 %v1615
    %1745 = vmatpush1.msra.mxu0 %v1614
    %1746 = vmatprep.subr.mxu0 %v1619
    %1747 = vmatpush1.msra.mxu0 %v1618
    %1748 = vmatprep.subr.mxu0 %v1623
    %1749 = vmatpush1.msra.mxu0 %v1622
    %1750 = vmatprep.subr.mxu0 %v1627
    %1751 = vmatpush1.msra.mxu0 %v1626
    %1752 = vmatprep.subr.mxu0 0.0
    %1753 = vmatpush1.msra.mxu0 0.0
    %1754 = vmatprep.subr.mxu0 0.0
    %1755 = vmatpush1.msra.mxu0 0.0
    %1756 = vmatprep.subr.mxu0 0.0
    %1757 = vmatpush1.msra.mxu0 0.0
    %1758 = vmatprep.subr.mxu0 0.0
    %1759 = vmatpush1.msra.mxu0 0.0
    %1760 = vmatprep.subr.mxu0 0.0
    %1761 = vmatpush1.msra.mxu0 0.0
    %1762 = vmatprep.subr.mxu0 0.0
    %1763 = vmatpush1.msra.mxu0 0.0
    %1764 = vmatprep.subr.mxu0 0.0
    %1765 = vmatpush1.msra.mxu0 0.0
    %1766 = vmatprep.subr.mxu0 0.0
    %1767 = vmatpush1.msra.mxu0 0.0
    %1768 = vmatprep.subr.mxu0 0.0
    %1769 = vmatpush1.msra.mxu0 0.0
    %1770 = vmatprep.subr.mxu0 0.0
    %1771 = vmatpush1.msra.mxu0 0.0
    %1772 = vmatprep.subr.mxu0 0.0
    %1773 = vmatpush1.msra.mxu0 0.0
    %1774 = vmatprep.subr.mxu0 0.0
    %1775 = vmatpush1.msra.mxu0 0.0
    %1776 = vmatprep.subr.mxu0 0.0
    %1777 = vmatpush1.msra.mxu0 0.0
    %1778 = vmatprep.subr.mxu0 0.0
    %1779 = vmatpush1.msra.mxu0 0.0
    %1780 = vmatprep.subr.mxu0 0.0
    %1781 = vmatpush1.msra.mxu0 0.0
    %1782 = vmatprep.subr.mxu0 0.0
    %1783 = vmatpush1.msra.mxu0 0.0
    %1784 = vmatprep.mubr.f32.mxu0 0.0
    %1785 = vmatmul.mubr.f32.gmra.mrb[0].mxu0 %v1560
    %v1786 = vpop.f32.mrb[0].mxu0
    %v1787 = vadd.f32 %v1640, %v1786
    %v1788 = vpop.f32.mrb[0].mxu0
    %v1789 = vadd.f32 %v1644, %v1788
    %1790 = vdwg.mxu0
    %v1791 = vxor.u32 %v1716, 2147483648
    %v1792 = vmul.f32 %v1791, 1.442695
    %v1793 = vpow.pop %v1792
    %v1794 = vadd.f32 %v1793, 1.0
    %v1795 = vrcp.pop %v1794
    %v1796 = vmul.f32 1.0, %v1795
    %v1797 = vxor.u32 %v1718, 2147483648
    %v1798 = vmul.f32 %v1797, 1.442695
    %v1799 = vpow.pop %v1798
    %v1800 = vadd.f32 %v1799, 1.0
    %v1801 = vrcp.pop %v1800
    %v1802 = vmul.f32 1.0, %v1801
    %v1803 = vtanh.pop %v1787
    %v1804 = vxor.u32 %v1789, 2147483648
    %v1805 = vmul.f32 %v1804, 1.442695
    %v1806 = vpow.pop %v1805
    %v1807 = vadd.f32 %v1806, 1.0
    %v1808 = vrcp.pop %v1807
    %v1809 = vmul.f32 1.0, %v1808
    %v1810 = vmul.f32 %v1802, %v1558
    %v1811 = vmul.f32 %v1796, %v1803
    %v1812 = vadd.f32 %v1810, %v1811
    %v1813 = vtanh.pop %v1812
    %v1814 = vmul.f32 %v1809, %v1813
    %1815 = vst [vmem:[#allocation7 + $0x6] sm:$0x1] %v1814
    %s1816 = scalar_lea.vmem [#allocation2], 7
    %v1817 = vld [vmem:[%s1816] ss:$8 sm:$0xf]
    %v1818 = vld [vmem:[#allocation5] sm:$0xff]
    %v1819 = vld [vmem:[#allocation5 + $0x8] sm:$0xff]
    %v1820 = vld [vmem:[#allocation5 + $0x10] sm:$0xff]
    %v1821 = vld [vmem:[#allocation5 + $0x18] sm:$0xff]
    %v1822 = vld [vmem:[#allocation5 + $0x20] sm:$0xff]
    %v1823 = vld [vmem:[#allocation5 + $0x28] sm:$0xff]
    %v1824 = vld [vmem:[#allocation5 + $0x30] sm:$0xff]
    %v1825 = vld [vmem:[#allocation5 + $0x38] sm:$0xff]
    %v1826 = vld [vmem:[#allocation5 + $0x40] sm:$0xff]
    %v1827 = vld [vmem:[#allocation5 + $0x48] sm:$0xff]
    %v1828 = vld [vmem:[#allocation5 + $0x50] sm:$0xff]
    %v1829 = vld [vmem:[#allocation5 + $0x58] sm:$0xff]
    %v1830 = vld [vmem:[#allocation5 + $0x60] sm:$0xff]
    %v1831 = vld [vmem:[#allocation5 + $0x68] sm:$0xff]
    %v1832 = vld [vmem:[#allocation5 + $0x70] sm:$0xff]
    %v1833 = vld [vmem:[#allocation5 + $0x78] sm:$0xff]
    %v1834 = vld [vmem:[#allocation5 + $0x80] sm:$0xff]
    %v1835 = vld [vmem:[#allocation5 + $0x88] sm:$0xff]
    %v1836 = vld [vmem:[#allocation5 + $0x90] sm:$0xff]
    %v1837 = vld [vmem:[#allocation5 + $0x98] sm:$0xff]
    %v1838 = vld [vmem:[#allocation5 + $0xa0] sm:$0xff]
    %v1839 = vld [vmem:[#allocation5 + $0xa8] sm:$0xff]
    %v1840 = vld [vmem:[#allocation5 + $0xb0] sm:$0xff]
    %v1841 = vld [vmem:[#allocation5 + $0xb8] sm:$0xff]
    %v1842 = vld [vmem:[#allocation5 + $0xc0] sm:$0xff]
    %v1843 = vld [vmem:[#allocation5 + $0xc8] sm:$0xff]
    %v1844 = vld [vmem:[#allocation5 + $0xd0] sm:$0xff]
    %v1845 = vld [vmem:[#allocation5 + $0xd8] sm:$0xff]
    %v1846 = vld [vmem:[#allocation5 + $0xe0] sm:$0xff]
    %v1847 = vld [vmem:[#allocation5 + $0xe8] sm:$0xff]
    %v1848 = vld [vmem:[#allocation5 + $0xf0] sm:$0xff]
    %v1849 = vld [vmem:[#allocation5 + $0xf8] sm:$0xff]
    %v1850 = vld [vmem:[#allocation5 + $0x100] sm:$0xff]
    %v1851 = vld [vmem:[#allocation5 + $0x108] sm:$0xff]
    %v1852 = vld [vmem:[#allocation5 + $0x110] sm:$0xff]
    %v1853 = vld [vmem:[#allocation5 + $0x118] sm:$0xff]
    %v1854 = vld [vmem:[#allocation5 + $0x120] sm:$0xff]
    %v1855 = vld [vmem:[#allocation5 + $0x128] sm:$0xff]
    %v1856 = vld [vmem:[#allocation5 + $0x130] sm:$0xff]
    %v1857 = vld [vmem:[#allocation5 + $0x138] sm:$0xff]
    %v1858 = vld [vmem:[#allocation5 + $0x140] sm:$0xff]
    %v1859 = vld [vmem:[#allocation5 + $0x148] sm:$0xff]
    %v1860 = vld [vmem:[#allocation5 + $0x150] sm:$0xff]
    %v1861 = vld [vmem:[#allocation5 + $0x158] sm:$0xff]
    %v1862 = vld [vmem:[#allocation5 + $0x160] sm:$0xff]
    %v1863 = vld [vmem:[#allocation5 + $0x168] sm:$0xff]
    %v1864 = vld [vmem:[#allocation5 + $0x170] sm:$0xff]
    %v1865 = vld [vmem:[#allocation5 + $0x178] sm:$0xff]
    %v1866 = vld [vmem:[#allocation5 + $0x180] sm:$0xff]
    %v1867 = vld [vmem:[#allocation5 + $0x188] sm:$0xff]
    %v1868 = vld [vmem:[#allocation5 + $0x190] sm:$0xff]
    %v1869 = vld [vmem:[#allocation5 + $0x198] sm:$0xff]
    %v1870 = vld [vmem:[#allocation5 + $0x1a0] sm:$0xff]
    %v1871 = vld [vmem:[#allocation5 + $0x1a8] sm:$0xff]
    %v1872 = vld [vmem:[#allocation5 + $0x1b0] sm:$0xff]
    %v1873 = vld [vmem:[#allocation5 + $0x1b8] sm:$0xff]
    %v1874 = vld [vmem:[#allocation5 + $0x1c0] sm:$0xff]
    %v1875 = vld [vmem:[#allocation5 + $0x1c8] sm:$0xff]
    %v1876 = vld [vmem:[#allocation5 + $0x1d0] sm:$0xff]
    %v1877 = vld [vmem:[#allocation5 + $0x1d8] sm:$0xff]
    %v1878 = vld [vmem:[#allocation5 + $0x1e0] sm:$0xff]
    %v1879 = vld [vmem:[#allocation5 + $0x1e8] sm:$0xff]
    %v1880 = vld [vmem:[#allocation5 + $0x1f0] sm:$0xff]
    %v1881 = vld [vmem:[#allocation5 + $0x1f8] sm:$0xff]
    %v1883 = vlaneseq
    %v1884 = vshrl.u32 %v1883, 7
    %v1885 = vsub.s32 0, %v1884
    %v1886 = vrot.slane %v1817, %v1885
    %v1887 = vlaneseq
    %v1888 = vshrl.u32 %v1887, 7
    %v1889 = vsub.s32 1, %v1888
    %v1890 = vrot.slane %v1817, %v1889
    %v1891 = vlaneseq
    %v1892 = vshrl.u32 %v1891, 7
    %v1893 = vsub.s32 2, %v1892
    %v1894 = vrot.slane %v1817, %v1893
    %v1895 = vlaneseq
    %v1896 = vshrl.u32 %v1895, 7
    %v1897 = vsub.s32 3, %v1896
    %v1898 = vrot.slane %v1817, %v1897
    %1903 = vmatprep.subr.mxu0 %v1819
    %1904 = vmatpush1.msra.mxu0 %v1818
    %1905 = vmatprep.subr.mxu0 %v1823
    %1906 = vmatpush1.msra.mxu0 %v1822
    %1907 = vmatprep.subr.mxu0 %v1827
    %1908 = vmatpush1.msra.mxu0 %v1826
    %1909 = vmatprep.subr.mxu0 %v1831
    %1910 = vmatpush1.msra.mxu0 %v1830
    %1911 = vmatprep.subr.mxu0 %v1835
    %1912 = vmatpush1.msra.mxu0 %v1834
    %1913 = vmatprep.subr.mxu0 %v1839
    %1914 = vmatpush1.msra.mxu0 %v1838
    %1915 = vmatprep.subr.mxu0 %v1843
    %1916 = vmatpush1.msra.mxu0 %v1842
    %1917 = vmatprep.subr.mxu0 %v1847
    %1918 = vmatpush1.msra.mxu0 %v1846
    %1919 = vmatprep.subr.mxu0 %v1851
    %1920 = vmatpush1.msra.mxu0 %v1850
    %1921 = vmatprep.subr.mxu0 %v1855
    %1922 = vmatpush1.msra.mxu0 %v1854
    %1923 = vmatprep.subr.mxu0 %v1859
    %1924 = vmatpush1.msra.mxu0 %v1858
    %1925 = vmatprep.subr.mxu0 %v1863
    %1926 = vmatpush1.msra.mxu0 %v1862
    %1927 = vmatprep.subr.mxu0 %v1867
    %1928 = vmatpush1.msra.mxu0 %v1866
    %1929 = vmatprep.subr.mxu0 %v1871
    %1930 = vmatpush1.msra.mxu0 %v1870
    %1931 = vmatprep.subr.mxu0 %v1875
    %1932 = vmatpush1.msra.mxu0 %v1874
    %1933 = vmatprep.subr.mxu0 %v1879
    %1934 = vmatpush1.msra.mxu0 %v1878
    %1935 = vmatprep.subr.mxu0 0.0
    %1936 = vmatpush1.msra.mxu0 0.0
    %1937 = vmatprep.subr.mxu0 0.0
    %1938 = vmatpush1.msra.mxu0 0.0
    %1939 = vmatprep.subr.mxu0 0.0
    %1940 = vmatpush1.msra.mxu0 0.0
    %1941 = vmatprep.subr.mxu0 0.0
    %1942 = vmatpush1.msra.mxu0 0.0
    %1943 = vmatprep.subr.mxu0 0.0
    %1944 = vmatpush1.msra.mxu0 0.0
    %1945 = vmatprep.subr.mxu0 0.0
    %1946 = vmatpush1.msra.mxu0 0.0
    %1947 = vmatprep.subr.mxu0 0.0
    %1948 = vmatpush1.msra.mxu0 0.0
    %1949 = vmatprep.subr.mxu0 0.0
    %1950 = vmatpush1.msra.mxu0 0.0
    %1951 = vmatprep.subr.mxu0 0.0
    %1952 = vmatpush1.msra.mxu0 0.0
    %1953 = vmatprep.subr.mxu0 0.0
    %1954 = vmatpush1.msra.mxu0 0.0
    %1955 = vmatprep.subr.mxu0 0.0
    %1956 = vmatpush1.msra.mxu0 0.0
    %1957 = vmatprep.subr.mxu0 0.0
    %1958 = vmatpush1.msra.mxu0 0.0
    %1959 = vmatprep.subr.mxu0 0.0
    %1960 = vmatpush1.msra.mxu0 0.0
    %1961 = vmatprep.subr.mxu0 0.0
    %1962 = vmatpush1.msra.mxu0 0.0
    %1963 = vmatprep.subr.mxu0 0.0
    %1964 = vmatpush1.msra.mxu0 0.0
    %1965 = vmatprep.subr.mxu0 0.0
    %1966 = vmatpush1.msra.mxu0 0.0
    %1967 = vmatprep.mubr.f32.mxu0 0.0
    %1968 = vmatmul.mubr.f32.gmra.mrb[0].mxu0 %v1814
    %v1969 = vpop.f32.mrb[0].mxu0
    %v1970 = vadd.f32 %v1886, %v1969
    %v1971 = vpop.f32.mrb[0].mxu0
    %v1972 = vadd.f32 %v1890, %v1971
    %1973 = vdwg.mxu0
    %1974 = vmatprep.subr.mxu0 %v1821
    %1975 = vmatpush1.msra.mxu0 %v1820
    %1976 = vmatprep.subr.mxu0 %v1825
    %1977 = vmatpush1.msra.mxu0 %v1824
    %1978 = vmatprep.subr.mxu0 %v1829
    %1979 = vmatpush1.msra.mxu0 %v1828
    %1980 = vmatprep.subr.mxu0 %v1833
    %1981 = vmatpush1.msra.mxu0 %v1832
    %1982 = vmatprep.subr.mxu0 %v1837
    %1983 = vmatpush1.msra.mxu0 %v1836
    %1984 = vmatprep.subr.mxu0 %v1841
    %1985 = vmatpush1.msra.mxu0 %v1840
    %1986 = vmatprep.subr.mxu0 %v1845
    %1987 = vmatpush1.msra.mxu0 %v1844
    %1988 = vmatprep.subr.mxu0 %v1849
    %1989 = vmatpush1.msra.mxu0 %v1848
    %1990 = vmatprep.subr.mxu0 %v1853
    %1991 = vmatpush1.msra.mxu0 %v1852
    %1992 = vmatprep.subr.mxu0 %v1857
    %1993 = vmatpush1.msra.mxu0 %v1856
    %1994 = vmatprep.subr.mxu0 %v1861
    %1995 = vmatpush1.msra.mxu0 %v1860
    %1996 = vmatprep.subr.mxu0 %v1865
    %1997 = vmatpush1.msra.mxu0 %v1864
    %1998 = vmatprep.subr.mxu0 %v1869
    %1999 = vmatpush1.msra.mxu0 %v1868
    %2000 = vmatprep.subr.mxu0 %v1873
    %2001 = vmatpush1.msra.mxu0 %v1872
    %2002 = vmatprep.subr.mxu0 %v1877
    %2003 = vmatpush1.msra.mxu0 %v1876
    %2004 = vmatprep.subr.mxu0 %v1881
    %2005 = vmatpush1.msra.mxu0 %v1880
    %2006 = vmatprep.subr.mxu0 0.0
    %2007 = vmatpush1.msra.mxu0 0.0
    %2008 = vmatprep.subr.mxu0 0.0
    %2009 = vmatpush1.msra.mxu0 0.0
    %2010 = vmatprep.subr.mxu0 0.0
    %2011 = vmatpush1.msra.mxu0 0.0
    %2012 = vmatprep.subr.mxu0 0.0
    %2013 = vmatpush1.msra.mxu0 0.0
    %2014 = vmatprep.subr.mxu0 0.0
    %2015 = vmatpush1.msra.mxu0 0.0
    %2016 = vmatprep.subr.mxu0 0.0
    %2017 = vmatpush1.msra.mxu0 0.0
    %2018 = vmatprep.subr.mxu0 0.0
    %2019 = vmatpush1.msra.mxu0 0.0
    %2020 = vmatprep.subr.mxu0 0.0
    %2021 = vmatpush1.msra.mxu0 0.0
    %2022 = vmatprep.subr.mxu0 0.0
    %2023 = vmatpush1.msra.mxu0 0.0
    %2024 = vmatprep.subr.mxu0 0.0
    %2025 = vmatpush1.msra.mxu0 0.0
    %2026 = vmatprep.subr.mxu0 0.0
    %2027 = vmatpush1.msra.mxu0 0.0
    %2028 = vmatprep.subr.mxu0 0.0
    %2029 = vmatpush1.msra.mxu0 0.0
    %2030 = vmatprep.subr.mxu0 0.0
    %2031 = vmatpush1.msra.mxu0 0.0
    %2032 = vmatprep.subr.mxu0 0.0
    %2033 = vmatpush1.msra.mxu0 0.0
    %2034 = vmatprep.subr.mxu0 0.0
    %2035 = vmatpush1.msra.mxu0 0.0
    %2036 = vmatprep.subr.mxu0 0.0
    %2037 = vmatpush1.msra.mxu0 0.0
    %2038 = vmatprep.mubr.f32.mxu0 0.0
    %2039 = vmatmul.mubr.f32.gmra.mrb[0].mxu0 %v1814
    %v2040 = vpop.f32.mrb[0].mxu0
    %v2041 = vadd.f32 %v1894, %v2040
    %v2042 = vpop.f32.mrb[0].mxu0
    %v2043 = vadd.f32 %v1898, %v2042
    %2044 = vdwg.mxu0
    %v2045 = vxor.u32 %v1970, 2147483648
    %v2046 = vmul.f32 %v2045, 1.442695
    %v2047 = vpow.pop %v2046
    %v2048 = vadd.f32 %v2047, 1.0
    %v2049 = vrcp.pop %v2048
    %v2050 = vmul.f32 1.0, %v2049
    %v2051 = vxor.u32 %v1972, 2147483648
    %v2052 = vmul.f32 %v2051, 1.442695
    %v2053 = vpow.pop %v2052
    %v2054 = vadd.f32 %v2053, 1.0
    %v2055 = vrcp.pop %v2054
    %v2056 = vmul.f32 1.0, %v2055
    %v2057 = vtanh.pop %v2041
    %v2058 = vxor.u32 %v2043, 2147483648
    %v2059 = vmul.f32 %v2058, 1.442695
    %v2060 = vpow.pop %v2059
    %v2061 = vadd.f32 %v2060, 1.0
    %v2062 = vrcp.pop %v2061
    %v2063 = vmul.f32 1.0, %v2062
    %v2064 = vmul.f32 %v2056, %v1812
    %v2065 = vmul.f32 %v2050, %v2057
    %v2066 = vadd.f32 %v2064, %v2065
    %v2067 = vtanh.pop %v2066
    %v2068 = vmul.f32 %v2063, %v2067
    %2069 = vst [vmem:[#allocation7 + $0x7] sm:$0x1] %v2068
    // Predicated region
    $region18: #{tpu_custom_call.1} parent=1 // pred_check
      _
    $region19: #{tpu_custom_call.1} parent=1 // pred_check_branch
      %2071 = sbr.rel (0) target = $region21
    $region20: #{tpu_custom_call.1} parent=1 // pred_region
      %s2073 = ssub.s32 128, 128
      %2074 = vsyncadd [#allocation4], %s2073
      %s2076 = sshll.u32 [#allocation7], 4
      %s2077 = int_to_ptr.vmem [resolvable:$true] %s2076
      %2079 = dma.vmem_to_hbm [thread:$0]  %s2077, 128, %s2, [#allocation4]
    $region21: #{tpu_custom_call.1} parent=1 // pred_fallthru
      _
    // Predicated region
    $region22: #{tpu_custom_call.1} parent=1 // pred_check
      _
    $region23: #{tpu_custom_call.1} parent=1 // pred_check_branch
      %2081 = sbr.rel (0) target = $region25
    $region24: #{tpu_custom_call.1} parent=1 // pred_region
      %2082 = dma.done [#allocation4], 128
    $region25: #{tpu_custom_call.1} parent=1 // pred_fallthru
      _
    %2083 = vsyncpa [#allocation3], 1
    %2084 = vsyncpa [#allocation6], 1
    %2085 = vsyncpa [#allocation4], 1

</llo_original>
